<compile_context>
chip_gen: v6e
topology: v6e:2x2x1
jax: 0.10.0
libtpu: 0.0.40
codegen_flags: <defaults>
</compile_context>

<pallas_src>
import math
import functools

import jax
import jax.numpy as jnp
from jax.experimental import pallas as pl
from jax.experimental.pallas import tpu as pltpu


def _mha_body(q_ref, h_ref, wq_ref, wk_ref, wv_ref, wo_ref, o_ref, *,
              n_heads, tb, n_query, graph_size, norm_factor, mask_ref=None):
    """One grid step: `tb` batch rows, all heads (static in-kernel loop)."""
    # Fold 1/sqrt(key_dim) into Q once per block (cheaper than scaling the
    # (n_query, graph_size) score matrix per head).
    qf = q_ref[...] * norm_factor          # (tb*n_query, input_dim)
    hf = h_ref[...]                        # (tb*graph_size, input_dim)

    if mask_ref is not None:
        m = mask_ref[...] != 0             # (tb, n_query, graph_size) bool

    acc = jnp.zeros(o_ref.shape, jnp.float32)      # (tb*n_query, embed_dim)

    # Head loop fully unrolled: weight stacks stay resident in VMEM (constant
    # index_map => no per-head DMA), no grid-step overhead per head.
    for hh in range(n_heads):
        # Projections on the MXU: operands at input dtype, f32 accumulation.
        Q = jnp.dot(qf, wq_ref[hh], preferred_element_type=jnp.float32)
        K = jnp.dot(hf, wk_ref[hh], preferred_element_type=jnp.float32)
        V = jnp.dot(hf, wv_ref[hh], preferred_element_type=jnp.float32)

        Q3 = Q.reshape(tb, n_query, -1)
        K3 = K.reshape(tb, graph_size, -1)
        V3 = V.reshape(tb, graph_size, -1)

        # Batched Q @ K^T (contract key_dim, batch over tb).
        s = jax.lax.dot_general(Q3, K3, (((2,), (2,)), ((0,), (0,))),
                                preferred_element_type=jnp.float32)
        if mask_ref is not None:
            # Large finite negative (not -inf): avoids inf-inf = NaN in the
            # max-subtract step when a row is fully masked.
            s = jnp.where(m, -1e30, s)

        # Softmax in f32; the divide goes to the EUP (approx reciprocal).
        s = s - jnp.max(s, axis=-1, keepdims=True)
        p = jnp.exp(s)
        p = p * pl.reciprocal(jnp.sum(p, axis=-1, keepdims=True), approx=True)
        if mask_ref is not None:
            p = jnp.where(m, 0.0, p)

        heads = jax.lax.dot_general(p, V3, (((2,), (1,)), ((0,), (0,))),
                                    preferred_element_type=jnp.float32)

        # Output projection folded into the head reduction:
        #   out = sum_h heads[h] @ W_out[h]
        acc = acc + jnp.dot(heads.reshape(tb * n_query, -1), wo_ref[hh],
                            preferred_element_type=jnp.float32)

    o_ref[...] = acc.astype(o_ref.dtype)


def _kernel_nomask(q_ref, h_ref, wq_ref, wk_ref, wv_ref, wo_ref, o_ref, **kw):
    _mha_body(q_ref, h_ref, wq_ref, wk_ref, wv_ref, wo_ref, o_ref,
              mask_ref=None, **kw)


def _kernel_mask(mask_ref, q_ref, h_ref, wq_ref, wk_ref, wv_ref, wo_ref, o_ref,
                 **kw):
    _mha_body(q_ref, h_ref, wq_ref, wk_ref, wv_ref, wo_ref, o_ref,
              mask_ref=mask_ref, **kw)


def _pick_batch_block(B, n_query, graph_size):
    """Pick TB (batches per grid step): ~256 rows per block to fill the MXU M
    dimension, row counts multiples of 8 (unless the block is the full array),
    and >= 2 grid steps when the batch allows it (v7x has two TensorCores)."""
    target = max(1, 256 // max(n_query, 1))
    divisors = [d for d in range(1, B + 1) if B % d == 0]

    def ok(d):
        return d == B or ((d * n_query) % 8 == 0 and (d * graph_size) % 8 == 0)

    cand = [d for d in divisors if ok(d)] or [B]
    multi = [d for d in cand if B // d >= 2]
    pool = multi if multi else cand
    ge = [d for d in pool if d >= target]
    return min(ge) if ge else max(pool)


def multi_head_attention_forward(q, W_query, W_key, W_val, W_out, h=None, mask=None):
    """q: (B, n_query, input_dim); h: (B, graph_size, input_dim) or None
    (self-attention). W_query/W_key: (n_heads, input_dim, key_dim);
    W_val: (n_heads, input_dim, val_dim); W_out: (n_heads, val_dim, embed_dim);
    mask: optional (B, n_query, graph_size) (True/1 = attention NOT allowed).
    Returns (B, n_query, embed_dim)."""
    if h is None:
        h = q
    B, G, input_dim = h.shape
    n_query = q.shape[1]
    n_heads, _, key_dim = W_query.shape
    val_dim = W_val.shape[-1]
    embed_dim = W_out.shape[-1]
    norm_factor = 1.0 / math.sqrt(key_dim)

    tb = _pick_batch_block(B, n_query, G)
    grid = (B // tb,)

    # Present q / h / out as flat 2-D slabs (lane/sublane-dense blocks).
    qf = q.reshape(B * n_query, input_dim)
    hf = h.reshape(B * G, input_dim)

    kw = dict(n_heads=n_heads, tb=tb, n_query=n_query, graph_size=G,
              norm_factor=norm_factor)

    in_specs = []
    args = []
    if mask is not None:
        if mask.ndim == 2:                     # viewable as (B, 1, G)
            mask = mask.reshape(B, n_query, G)
        # int8 mask: 4x less DMA than int32; last two block dims are the full
        # array dims so packed-dtype tiling constraints are not hit.
        in_specs.append(pl.BlockSpec((tb, n_query, G), lambda i: (i, 0, 0)))
        args.append(mask.astype(jnp.int8))
        kernel = functools.partial(_kernel_mask, **kw)
    else:
        kernel = functools.partial(_kernel_nomask, **kw)

    in_specs += [
        pl.BlockSpec((tb * n_query, input_dim), lambda i: (i, 0)),       # q
        pl.BlockSpec((tb * G, input_dim), lambda i: (i, 0)),             # h
        pl.BlockSpec((n_heads, input_dim, key_dim), lambda i: (0, 0, 0)),  # W_query
        pl.BlockSpec((n_heads, input_dim, key_dim), lambda i: (0, 0, 0)),  # W_key
        pl.BlockSpec((n_heads, input_dim, val_dim), lambda i: (0, 0, 0)),  # W_val
        pl.BlockSpec((n_heads, val_dim, embed_dim), lambda i: (0, 0, 0)),  # W_out
    ]
    args += [qf, hf, W_query, W_key, W_val, W_out]

    out2d = pl.pallas_call(
        kernel,
        out_shape=jax.ShapeDtypeStruct((B * n_query, embed_dim), q.dtype),
        grid=grid,
        in_specs=in_specs,
        out_specs=pl.BlockSpec((tb * n_query, embed_dim), lambda i: (i, 0)),
        compiler_params=pltpu.CompilerParams(
            dimension_semantics=("parallel",)),
    )(*args)
    return out2d.reshape(B, n_query, embed_dim)


def _mha_reference(q, h, Wq, Wk, Wv, Wo, mask=None):
    """Pure-JAX reference matching the PyTorch module (high-precision matmuls)."""
    hp = jax.lax.Precision.HIGHEST
    norm = 1.0 / math.sqrt(Wq.shape[-1])
    Q = jnp.einsum('bqi,hik->hbqk', q, Wq, precision=hp)
    K = jnp.einsum('bgi,hik->hbgk', h, Wk, precision=hp)
    V = jnp.einsum('bgi,hiv->hbgv', h, Wv, precision=hp)
    compat = norm * jnp.einsum('hbqk,hbgk->hbqg', Q, K, precision=hp)
    if mask is not None:
        compat = jnp.where(mask[None], -jnp.inf, compat)
    attn = jax.nn.softmax(compat, axis=-1)
    if mask is not None:
        attn = jnp.where(mask[None], 0.0, attn)
    heads = jnp.einsum('hbqg,hbgv->hbqv', attn, V, precision=hp)
    return jnp.einsum('hbqv,hve->bqe', heads, Wo, precision=hp)


if __name__ == "__main__":
    # Small shapes consistent with the module: 4 heads, embed_dim 32 -> key/val dim 8.
    n_heads, input_dim, embed_dim = 4, 32, 32
    key_dim = val_dim = embed_dim // n_heads
    B, n_query, graph_size = 2, 8, 8

    key = jax.random.PRNGKey(0)
    kq, k1, k2, k3, k4, km = jax.random.split(key, 6)

    q = jax.random.normal(kq, (B, n_query, input_dim), dtype=jnp.float32)

    # init_parameters(): uniform(-stdv, stdv), stdv = 1/sqrt(param.size(-1))
    def uinit(k, shape):
        stdv = 1.0 / math.sqrt(shape[-1])
        return jax.random.uniform(k, shape, minval=-stdv, maxval=stdv, dtype=jnp.float32)

    W_query = uinit(k1, (n_heads, input_dim, key_dim))
    W_key = uinit(k2, (n_heads, input_dim, key_dim))
    W_val = uinit(k3, (n_heads, input_dim, val_dim))
    W_out = uinit(k4, (n_heads, val_dim, embed_dim))

    # Self-attention (h=None), no mask.
    out = multi_head_attention_forward(q, W_query, W_key, W_val, W_out)
    out = jax.block_until_ready(out)
    ref = _mha_reference(q, q, W_query, W_key, W_val, W_out)
    assert jnp.allclose(out, ref, atol=1e-2, rtol=1e-2), float(jnp.max(jnp.abs(out - ref)))

    # Masked variant (no fully-masked rows, matching PyTorch-defined behavior).
    mask = jax.random.bernoulli(km, 0.3, (B, n_query, graph_size))
    mask = mask.at[:, :, 0].set(False)
    out_m = multi_head_attention_forward(q, W_query, W_key, W_val, W_out, mask=mask)
    out_m = jax.block_until_ready(out_m)
    ref_m = _mha_reference(q, q, W_query, W_key, W_val, W_out, mask=mask)
    assert jnp.allclose(out_m, ref_m, atol=1e-2, rtol=1e-2), float(jnp.max(jnp.abs(out_m - ref_m)))

    print("KERNEL_OK")
</pallas_src>

<mosaic_0001>
module attributes {stable_mosaic.version = 11 : i64} {
  func.func @_kernel_nomask(%arg0: i32, %arg1: memref<8x32xf32, #tpu.memory_space<vmem>>, %arg2: memref<8x32xf32, #tpu.memory_space<vmem>>, %arg3: memref<4x32x8xf32, #tpu.memory_space<vmem>>, %arg4: memref<4x32x8xf32, #tpu.memory_space<vmem>>, %arg5: memref<4x32x8xf32, #tpu.memory_space<vmem>>, %arg6: memref<4x8x32xf32, #tpu.memory_space<vmem>>, %arg7: memref<8x32xf32, #tpu.memory_space<vmem>>) attributes {dimension_semantics = [#tpu.dimension_semantics<parallel>], iteration_bounds = array<i64: 2>, scalar_prefetch = 0 : i64, scratch_operands = 0 : i64, tpu.core_type = #tpu.core_type<tc>, window_params = [{transform_indices = @transform_0, window_bounds = array<i64: 8, 32>}, {transform_indices = @transform_1, window_bounds = array<i64: 8, 32>}, {pipeline_mode = #tpu.pipeline_mode<synchronous>, transform_indices = @transform_2, window_bounds = array<i64: 4, 32, 8>}, {pipeline_mode = #tpu.pipeline_mode<synchronous>, transform_indices = @transform_3, window_bounds = array<i64: 4, 32, 8>}, {pipeline_mode = #tpu.pipeline_mode<synchronous>, transform_indices = @transform_4, window_bounds = array<i64: 4, 32, 8>}, {pipeline_mode = #tpu.pipeline_mode<synchronous>, transform_indices = @transform_5, window_bounds = array<i64: 4, 8, 32>}, {transform_indices = @transform_6, window_bounds = array<i64: 8, 32>}]} {
    %c0 = arith.constant 0 : index
    %c0_0 = arith.constant 0 : index
    %0 = vector.load %arg1[%c0, %c0_0] : memref<8x32xf32, #tpu.memory_space<vmem>>, vector<8x32xf32>
    %cst = arith.constant 0.353553385 : f32
    %1 = vector.broadcast %cst : f32 to vector<8x32xf32>
    %2 = arith.mulf %0, %1 : vector<8x32xf32>
    %c0_1 = arith.constant 0 : index
    %c0_2 = arith.constant 0 : index
    %3 = vector.load %arg2[%c0_1, %c0_2] : memref<8x32xf32, #tpu.memory_space<vmem>>, vector<8x32xf32>
    %cst_3 = arith.constant 0.000000e+00 : f32
    %4 = vector.broadcast %cst_3 : f32 to vector<8x32xf32>
    %c0_4 = arith.constant 0 : index
    %c0_5 = arith.constant 0 : index
    %c0_6 = arith.constant 0 : index
    %5 = vector.load %arg3[%c0_4, %c0_5, %c0_6] : memref<4x32x8xf32, #tpu.memory_space<vmem>>, vector<1x32x8xf32>
    %6 = vector.shape_cast %5 : vector<1x32x8xf32> to vector<32x8xf32>
    %cst_7 = arith.constant dense<0.000000e+00> : vector<8x8xf32>
    %7 = tpu.matmul %2, %6, %cst_7 {dimension_numbers = #tpu.dot_dimension_numbers<[1], [0], [0], [1], [0, 0, 1, 1], [], []>} : vector<8x32xf32>, vector<32x8xf32>, vector<8x8xf32> -> vector<8x8xf32>
    %c0_8 = arith.constant 0 : index
    %c0_9 = arith.constant 0 : index
    %c0_10 = arith.constant 0 : index
    %8 = vector.load %arg4[%c0_8, %c0_9, %c0_10] : memref<4x32x8xf32, #tpu.memory_space<vmem>>, vector<1x32x8xf32>
    %9 = vector.shape_cast %8 : vector<1x32x8xf32> to vector<32x8xf32>
    %cst_11 = arith.constant dense<0.000000e+00> : vector<8x8xf32>
    %10 = tpu.matmul %3, %9, %cst_11 {dimension_numbers = #tpu.dot_dimension_numbers<[1], [0], [0], [1], [0, 0, 1, 1], [], []>} : vector<8x32xf32>, vector<32x8xf32>, vector<8x8xf32> -> vector<8x8xf32>
    %c0_12 = arith.constant 0 : index
    %c0_13 = arith.constant 0 : index
    %c0_14 = arith.constant 0 : index
    %11 = vector.load %arg5[%c0_12, %c0_13, %c0_14] : memref<4x32x8xf32, #tpu.memory_space<vmem>>, vector<1x32x8xf32>
    %12 = vector.shape_cast %11 : vector<1x32x8xf32> to vector<32x8xf32>
    %cst_15 = arith.constant dense<0.000000e+00> : vector<8x8xf32>
    %13 = tpu.matmul %3, %12, %cst_15 {dimension_numbers = #tpu.dot_dimension_numbers<[1], [0], [0], [1], [0, 0, 1, 1], [], []>} : vector<8x32xf32>, vector<32x8xf32>, vector<8x8xf32> -> vector<8x8xf32>
    %14 = vector.shape_cast %7 : vector<8x8xf32> to vector<1x8x8xf32>
    %15 = vector.shape_cast %10 : vector<8x8xf32> to vector<1x8x8xf32>
    %16 = vector.shape_cast %13 : vector<8x8xf32> to vector<1x8x8xf32>
    %cst_16 = arith.constant dense<0.000000e+00> : vector<1x8x8xf32>
    %17 = tpu.matmul %14, %15, %cst_16 {dimension_numbers = #tpu.dot_dimension_numbers<[2], [2], [1], [1], [0, 0, 0, 1, 1, 1], [0], [0]>} : vector<1x8x8xf32>, vector<1x8x8xf32>, vector<1x8x8xf32> -> vector<1x8x8xf32>
    %cst_17 = arith.constant dense<0xFF800000> : vector<1x8xf32>
    %18 = vector.multi_reduction <maximumf>, %17, %cst_17 [2] : vector<1x8x8xf32> to vector<1x8xf32>
    %19 = vector.shape_cast %18 : vector<1x8xf32> to vector<1x8x1xf32>
    %20 = vector.broadcast %19 : vector<1x8x1xf32> to vector<1x8x8xf32>
    %21 = arith.subf %17, %20 : vector<1x8x8xf32>
    %22 = math.exp %21 : vector<1x8x8xf32>
    %cst_18 = arith.constant dense<0.000000e+00> : vector<1x8xf32>
    %23 = vector.multi_reduction <add>, %22, %cst_18 [2] : vector<1x8x8xf32> to vector<1x8xf32>
    %24 = vector.shape_cast %23 : vector<1x8xf32> to vector<1x8x1xf32>
    %25 = tpu.reciprocal %24 {approx = true} : vector<1x8x1xf32> -> vector<1x8x1xf32>
    %26 = vector.broadcast %25 : vector<1x8x1xf32> to vector<1x8x8xf32>
    %27 = arith.mulf %22, %26 : vector<1x8x8xf32>
    %cst_19 = arith.constant dense<0.000000e+00> : vector<1x8x8xf32>
    %28 = tpu.matmul %27, %16, %cst_19 {dimension_numbers = #tpu.dot_dimension_numbers<[2], [1], [1], [2], [0, 0, 0, 1, 1, 2], [0], [0]>} : vector<1x8x8xf32>, vector<1x8x8xf32>, vector<1x8x8xf32> -> vector<1x8x8xf32>
    %29 = vector.shape_cast %28 : vector<1x8x8xf32> to vector<8x8xf32>
    %c0_20 = arith.constant 0 : index
    %c0_21 = arith.constant 0 : index
    %c0_22 = arith.constant 0 : index
    %30 = vector.load %arg6[%c0_20, %c0_21, %c0_22] : memref<4x8x32xf32, #tpu.memory_space<vmem>>, vector<1x8x32xf32>
    %31 = vector.shape_cast %30 : vector<1x8x32xf32> to vector<8x32xf32>
    %cst_23 = arith.constant dense<0.000000e+00> : vector<8x32xf32>
    %32 = tpu.matmul %29, %31, %cst_23 {dimension_numbers = #tpu.dot_dimension_numbers<[1], [0], [0], [1], [0, 0, 1, 1], [], []>} : vector<8x8xf32>, vector<8x32xf32>, vector<8x32xf32> -> vector<8x32xf32>
    %33 = arith.addf %4, %32 : vector<8x32xf32>
    %c1 = arith.constant 1 : index
    %c0_24 = arith.constant 0 : index
    %c0_25 = arith.constant 0 : index
    %34 = vector.load %arg3[%c1, %c0_24, %c0_25] : memref<4x32x8xf32, #tpu.memory_space<vmem>>, vector<1x32x8xf32>
    %35 = vector.shape_cast %34 : vector<1x32x8xf32> to vector<32x8xf32>
    %cst_26 = arith.constant dense<0.000000e+00> : vector<8x8xf32>
    %36 = tpu.matmul %2, %35, %cst_26 {dimension_numbers = #tpu.dot_dimension_numbers<[1], [0], [0], [1], [0, 0, 1, 1], [], []>} : vector<8x32xf32>, vector<32x8xf32>, vector<8x8xf32> -> vector<8x8xf32>
    %c1_27 = arith.constant 1 : index
    %c0_28 = arith.constant 0 : index
    %c0_29 = arith.constant 0 : index
    %37 = vector.load %arg4[%c1_27, %c0_28, %c0_29] : memref<4x32x8xf32, #tpu.memory_space<vmem>>, vector<1x32x8xf32>
    %38 = vector.shape_cast %37 : vector<1x32x8xf32> to vector<32x8xf32>
    %cst_30 = arith.constant dense<0.000000e+00> : vector<8x8xf32>
    %39 = tpu.matmul %3, %38, %cst_30 {dimension_numbers = #tpu.dot_dimension_numbers<[1], [0], [0], [1], [0, 0, 1, 1], [], []>} : vector<8x32xf32>, vector<32x8xf32>, vector<8x8xf32> -> vector<8x8xf32>
    %c1_31 = arith.constant 1 : index
    %c0_32 = arith.constant 0 : index
    %c0_33 = arith.constant 0 : index
    %40 = vector.load %arg5[%c1_31, %c0_32, %c0_33] : memref<4x32x8xf32, #tpu.memory_space<vmem>>, vector<1x32x8xf32>
    %41 = vector.shape_cast %40 : vector<1x32x8xf32> to vector<32x8xf32>
    %cst_34 = arith.constant dense<0.000000e+00> : vector<8x8xf32>
    %42 = tpu.matmul %3, %41, %cst_34 {dimension_numbers = #tpu.dot_dimension_numbers<[1], [0], [0], [1], [0, 0, 1, 1], [], []>} : vector<8x32xf32>, vector<32x8xf32>, vector<8x8xf32> -> vector<8x8xf32>
    %43 = vector.shape_cast %36 : vector<8x8xf32> to vector<1x8x8xf32>
    %44 = vector.shape_cast %39 : vector<8x8xf32> to vector<1x8x8xf32>
    %45 = vector.shape_cast %42 : vector<8x8xf32> to vector<1x8x8xf32>
    %cst_35 = arith.constant dense<0.000000e+00> : vector<1x8x8xf32>
    %46 = tpu.matmul %43, %44, %cst_35 {dimension_numbers = #tpu.dot_dimension_numbers<[2], [2], [1], [1], [0, 0, 0, 1, 1, 1], [0], [0]>} : vector<1x8x8xf32>, vector<1x8x8xf32>, vector<1x8x8xf32> -> vector<1x8x8xf32>
    %cst_36 = arith.constant dense<0xFF800000> : vector<1x8xf32>
    %47 = vector.multi_reduction <maximumf>, %46, %cst_36 [2] : vector<1x8x8xf32> to vector<1x8xf32>
    %48 = vector.shape_cast %47 : vector<1x8xf32> to vector<1x8x1xf32>
    %49 = vector.broadcast %48 : vector<1x8x1xf32> to vector<1x8x8xf32>
    %50 = arith.subf %46, %49 : vector<1x8x8xf32>
    %51 = math.exp %50 : vector<1x8x8xf32>
    %cst_37 = arith.constant dense<0.000000e+00> : vector<1x8xf32>
    %52 = vector.multi_reduction <add>, %51, %cst_37 [2] : vector<1x8x8xf32> to vector<1x8xf32>
    %53 = vector.shape_cast %52 : vector<1x8xf32> to vector<1x8x1xf32>
    %54 = tpu.reciprocal %53 {approx = true} : vector<1x8x1xf32> -> vector<1x8x1xf32>
    %55 = vector.broadcast %54 : vector<1x8x1xf32> to vector<1x8x8xf32>
    %56 = arith.mulf %51, %55 : vector<1x8x8xf32>
    %cst_38 = arith.constant dense<0.000000e+00> : vector<1x8x8xf32>
    %57 = tpu.matmul %56, %45, %cst_38 {dimension_numbers = #tpu.dot_dimension_numbers<[2], [1], [1], [2], [0, 0, 0, 1, 1, 2], [0], [0]>} : vector<1x8x8xf32>, vector<1x8x8xf32>, vector<1x8x8xf32> -> vector<1x8x8xf32>
    %58 = vector.shape_cast %57 : vector<1x8x8xf32> to vector<8x8xf32>
    %c1_39 = arith.constant 1 : index
    %c0_40 = arith.constant 0 : index
    %c0_41 = arith.constant 0 : index
    %59 = vector.load %arg6[%c1_39, %c0_40, %c0_41] : memref<4x8x32xf32, #tpu.memory_space<vmem>>, vector<1x8x32xf32>
    %60 = vector.shape_cast %59 : vector<1x8x32xf32> to vector<8x32xf32>
    %cst_42 = arith.constant dense<0.000000e+00> : vector<8x32xf32>
    %61 = tpu.matmul %58, %60, %cst_42 {dimension_numbers = #tpu.dot_dimension_numbers<[1], [0], [0], [1], [0, 0, 1, 1], [], []>} : vector<8x8xf32>, vector<8x32xf32>, vector<8x32xf32> -> vector<8x32xf32>
    %62 = arith.addf %33, %61 : vector<8x32xf32>
    %c2 = arith.constant 2 : index
    %c0_43 = arith.constant 0 : index
    %c0_44 = arith.constant 0 : index
    %63 = vector.load %arg3[%c2, %c0_43, %c0_44] : memref<4x32x8xf32, #tpu.memory_space<vmem>>, vector<1x32x8xf32>
    %64 = vector.shape_cast %63 : vector<1x32x8xf32> to vector<32x8xf32>
    %cst_45 = arith.constant dense<0.000000e+00> : vector<8x8xf32>
    %65 = tpu.matmul %2, %64, %cst_45 {dimension_numbers = #tpu.dot_dimension_numbers<[1], [0], [0], [1], [0, 0, 1, 1], [], []>} : vector<8x32xf32>, vector<32x8xf32>, vector<8x8xf32> -> vector<8x8xf32>
    %c2_46 = arith.constant 2 : index
    %c0_47 = arith.constant 0 : index
    %c0_48 = arith.constant 0 : index
    %66 = vector.load %arg4[%c2_46, %c0_47, %c0_48] : memref<4x32x8xf32, #tpu.memory_space<vmem>>, vector<1x32x8xf32>
    %67 = vector.shape_cast %66 : vector<1x32x8xf32> to vector<32x8xf32>
    %cst_49 = arith.constant dense<0.000000e+00> : vector<8x8xf32>
    %68 = tpu.matmul %3, %67, %cst_49 {dimension_numbers = #tpu.dot_dimension_numbers<[1], [0], [0], [1], [0, 0, 1, 1], [], []>} : vector<8x32xf32>, vector<32x8xf32>, vector<8x8xf32> -> vector<8x8xf32>
    %c2_50 = arith.constant 2 : index
    %c0_51 = arith.constant 0 : index
    %c0_52 = arith.constant 0 : index
    %69 = vector.load %arg5[%c2_50, %c0_51, %c0_52] : memref<4x32x8xf32, #tpu.memory_space<vmem>>, vector<1x32x8xf32>
    %70 = vector.shape_cast %69 : vector<1x32x8xf32> to vector<32x8xf32>
    %cst_53 = arith.constant dense<0.000000e+00> : vector<8x8xf32>
    %71 = tpu.matmul %3, %70, %cst_53 {dimension_numbers = #tpu.dot_dimension_numbers<[1], [0], [0], [1], [0, 0, 1, 1], [], []>} : vector<8x32xf32>, vector<32x8xf32>, vector<8x8xf32> -> vector<8x8xf32>
    %72 = vector.shape_cast %65 : vector<8x8xf32> to vector<1x8x8xf32>
    %73 = vector.shape_cast %68 : vector<8x8xf32> to vector<1x8x8xf32>
    %74 = vector.shape_cast %71 : vector<8x8xf32> to vector<1x8x8xf32>
    %cst_54 = arith.constant dense<0.000000e+00> : vector<1x8x8xf32>
    %75 = tpu.matmul %72, %73, %cst_54 {dimension_numbers = #tpu.dot_dimension_numbers<[2], [2], [1], [1], [0, 0, 0, 1, 1, 1], [0], [0]>} : vector<1x8x8xf32>, vector<1x8x8xf32>, vector<1x8x8xf32> -> vector<1x8x8xf32>
    %cst_55 = arith.constant dense<0xFF800000> : vector<1x8xf32>
    %76 = vector.multi_reduction <maximumf>, %75, %cst_55 [2] : vector<1x8x8xf32> to vector<1x8xf32>
    %77 = vector.shape_cast %76 : vector<1x8xf32> to vector<1x8x1xf32>
    %78 = vector.broadcast %77 : vector<1x8x1xf32> to vector<1x8x8xf32>
    %79 = arith.subf %75, %78 : vector<1x8x8xf32>
    %80 = math.exp %79 : vector<1x8x8xf32>
    %cst_56 = arith.constant dense<0.000000e+00> : vector<1x8xf32>
    %81 = vector.multi_reduction <add>, %80, %cst_56 [2] : vector<1x8x8xf32> to vector<1x8xf32>
    %82 = vector.shape_cast %81 : vector<1x8xf32> to vector<1x8x1xf32>
    %83 = tpu.reciprocal %82 {approx = true} : vector<1x8x1xf32> -> vector<1x8x1xf32>
    %84 = vector.broadcast %83 : vector<1x8x1xf32> to vector<1x8x8xf32>
    %85 = arith.mulf %80, %84 : vector<1x8x8xf32>
    %cst_57 = arith.constant dense<0.000000e+00> : vector<1x8x8xf32>
    %86 = tpu.matmul %85, %74, %cst_57 {dimension_numbers = #tpu.dot_dimension_numbers<[2], [1], [1], [2], [0, 0, 0, 1, 1, 2], [0], [0]>} : vector<1x8x8xf32>, vector<1x8x8xf32>, vector<1x8x8xf32> -> vector<1x8x8xf32>
    %87 = vector.shape_cast %86 : vector<1x8x8xf32> to vector<8x8xf32>
    %c2_58 = arith.constant 2 : index
    %c0_59 = arith.constant 0 : index
    %c0_60 = arith.constant 0 : index
    %88 = vector.load %arg6[%c2_58, %c0_59, %c0_60] : memref<4x8x32xf32, #tpu.memory_space<vmem>>, vector<1x8x32xf32>
    %89 = vector.shape_cast %88 : vector<1x8x32xf32> to vector<8x32xf32>
    %cst_61 = arith.constant dense<0.000000e+00> : vector<8x32xf32>
    %90 = tpu.matmul %87, %89, %cst_61 {dimension_numbers = #tpu.dot_dimension_numbers<[1], [0], [0], [1], [0, 0, 1, 1], [], []>} : vector<8x8xf32>, vector<8x32xf32>, vector<8x32xf32> -> vector<8x32xf32>
    %91 = arith.addf %62, %90 : vector<8x32xf32>
    %c3 = arith.constant 3 : index
    %c0_62 = arith.constant 0 : index
    %c0_63 = arith.constant 0 : index
    %92 = vector.load %arg3[%c3, %c0_62, %c0_63] : memref<4x32x8xf32, #tpu.memory_space<vmem>>, vector<1x32x8xf32>
    %93 = vector.shape_cast %92 : vector<1x32x8xf32> to vector<32x8xf32>
    %cst_64 = arith.constant dense<0.000000e+00> : vector<8x8xf32>
    %94 = tpu.matmul %2, %93, %cst_64 {dimension_numbers = #tpu.dot_dimension_numbers<[1], [0], [0], [1], [0, 0, 1, 1], [], []>} : vector<8x32xf32>, vector<32x8xf32>, vector<8x8xf32> -> vector<8x8xf32>
    %c3_65 = arith.constant 3 : index
    %c0_66 = arith.constant 0 : index
    %c0_67 = arith.constant 0 : index
    %95 = vector.load %arg4[%c3_65, %c0_66, %c0_67] : memref<4x32x8xf32, #tpu.memory_space<vmem>>, vector<1x32x8xf32>
    %96 = vector.shape_cast %95 : vector<1x32x8xf32> to vector<32x8xf32>
    %cst_68 = arith.constant dense<0.000000e+00> : vector<8x8xf32>
    %97 = tpu.matmul %3, %96, %cst_68 {dimension_numbers = #tpu.dot_dimension_numbers<[1], [0], [0], [1], [0, 0, 1, 1], [], []>} : vector<8x32xf32>, vector<32x8xf32>, vector<8x8xf32> -> vector<8x8xf32>
    %c3_69 = arith.constant 3 : index
    %c0_70 = arith.constant 0 : index
    %c0_71 = arith.constant 0 : index
    %98 = vector.load %arg5[%c3_69, %c0_70, %c0_71] : memref<4x32x8xf32, #tpu.memory_space<vmem>>, vector<1x32x8xf32>
    %99 = vector.shape_cast %98 : vector<1x32x8xf32> to vector<32x8xf32>
    %cst_72 = arith.constant dense<0.000000e+00> : vector<8x8xf32>
    %100 = tpu.matmul %3, %99, %cst_72 {dimension_numbers = #tpu.dot_dimension_numbers<[1], [0], [0], [1], [0, 0, 1, 1], [], []>} : vector<8x32xf32>, vector<32x8xf32>, vector<8x8xf32> -> vector<8x8xf32>
    %101 = vector.shape_cast %94 : vector<8x8xf32> to vector<1x8x8xf32>
    %102 = vector.shape_cast %97 : vector<8x8xf32> to vector<1x8x8xf32>
    %103 = vector.shape_cast %100 : vector<8x8xf32> to vector<1x8x8xf32>
    %cst_73 = arith.constant dense<0.000000e+00> : vector<1x8x8xf32>
    %104 = tpu.matmul %101, %102, %cst_73 {dimension_numbers = #tpu.dot_dimension_numbers<[2], [2], [1], [1], [0, 0, 0, 1, 1, 1], [0], [0]>} : vector<1x8x8xf32>, vector<1x8x8xf32>, vector<1x8x8xf32> -> vector<1x8x8xf32>
    %cst_74 = arith.constant dense<0xFF800000> : vector<1x8xf32>
    %105 = vector.multi_reduction <maximumf>, %104, %cst_74 [2] : vector<1x8x8xf32> to vector<1x8xf32>
    %106 = vector.shape_cast %105 : vector<1x8xf32> to vector<1x8x1xf32>
    %107 = vector.broadcast %106 : vector<1x8x1xf32> to vector<1x8x8xf32>
    %108 = arith.subf %104, %107 : vector<1x8x8xf32>
    %109 = math.exp %108 : vector<1x8x8xf32>
    %cst_75 = arith.constant dense<0.000000e+00> : vector<1x8xf32>
    %110 = vector.multi_reduction <add>, %109, %cst_75 [2] : vector<1x8x8xf32> to vector<1x8xf32>
    %111 = vector.shape_cast %110 : vector<1x8xf32> to vector<1x8x1xf32>
    %112 = tpu.reciprocal %111 {approx = true} : vector<1x8x1xf32> -> vector<1x8x1xf32>
    %113 = vector.broadcast %112 : vector<1x8x1xf32> to vector<1x8x8xf32>
    %114 = arith.mulf %109, %113 : vector<1x8x8xf32>
    %cst_76 = arith.constant dense<0.000000e+00> : vector<1x8x8xf32>
    %115 = tpu.matmul %114, %103, %cst_76 {dimension_numbers = #tpu.dot_dimension_numbers<[2], [1], [1], [2], [0, 0, 0, 1, 1, 2], [0], [0]>} : vector<1x8x8xf32>, vector<1x8x8xf32>, vector<1x8x8xf32> -> vector<1x8x8xf32>
    %116 = vector.shape_cast %115 : vector<1x8x8xf32> to vector<8x8xf32>
    %c3_77 = arith.constant 3 : index
    %c0_78 = arith.constant 0 : index
    %c0_79 = arith.constant 0 : index
    %117 = vector.load %arg6[%c3_77, %c0_78, %c0_79] : memref<4x8x32xf32, #tpu.memory_space<vmem>>, vector<1x8x32xf32>
    %118 = vector.shape_cast %117 : vector<1x8x32xf32> to vector<8x32xf32>
    %cst_80 = arith.constant dense<0.000000e+00> : vector<8x32xf32>
    %119 = tpu.matmul %116, %118, %cst_80 {dimension_numbers = #tpu.dot_dimension_numbers<[1], [0], [0], [1], [0, 0, 1, 1], [], []>} : vector<8x8xf32>, vector<8x32xf32>, vector<8x32xf32> -> vector<8x32xf32>
    %120 = arith.addf %91, %119 : vector<8x32xf32>
    %c0_81 = arith.constant 0 : index
    %c0_82 = arith.constant 0 : index
    %121 = vector.load %arg7[%c0_81, %c0_82] : memref<8x32xf32, #tpu.memory_space<vmem>>, vector<8x32xf32>
    tpu.vector_store %arg7[%c0_81, %c0_82], %120 {strides = array<i32>} : memref<8x32xf32, #tpu.memory_space<vmem>>, vector<8x32xf32>,
    return
  }
  func.func @transform_0(%arg0: i32) -> (i32, i32) {
    %c0_i32 = arith.constant 0 : i32
    %c0_i32_0 = arith.constant 0 : i32
    return %arg0, %c0_i32 : i32, i32
  }
  func.func @transform_1(%arg0: i32) -> (i32, i32) {
    %c0_i32 = arith.constant 0 : i32
    %c0_i32_0 = arith.constant 0 : i32
    return %arg0, %c0_i32 : i32, i32
  }
  func.func @transform_2(%arg0: i32) -> (i32, i32, i32) {
    %c0_i32 = arith.constant 0 : i32
    %c0_i32_0 = arith.constant 0 : i32
    %c0_i32_1 = arith.constant 0 : i32
    %c0_i32_2 = arith.constant 0 : i32
    return %c0_i32, %c0_i32_0, %c0_i32_1 : i32, i32, i32
  }
  func.func @transform_3(%arg0: i32) -> (i32, i32, i32) {
    %c0_i32 = arith.constant 0 : i32
    %c0_i32_0 = arith.constant 0 : i32
    %c0_i32_1 = arith.constant 0 : i32
    %c0_i32_2 = arith.constant 0 : i32
    return %c0_i32, %c0_i32_0, %c0_i32_1 : i32, i32, i32
  }
  func.func @transform_4(%arg0: i32) -> (i32, i32, i32) {
    %c0_i32 = arith.constant 0 : i32
    %c0_i32_0 = arith.constant 0 : i32
    %c0_i32_1 = arith.constant 0 : i32
    %c0_i32_2 = arith.constant 0 : i32
    return %c0_i32, %c0_i32_0, %c0_i32_1 : i32, i32, i32
  }
  func.func @transform_5(%arg0: i32) -> (i32, i32, i32) {
    %c0_i32 = arith.constant 0 : i32
    %c0_i32_0 = arith.constant 0 : i32
    %c0_i32_1 = arith.constant 0 : i32
    %c0_i32_2 = arith.constant 0 : i32
    return %c0_i32, %c0_i32_0, %c0_i32_1 : i32, i32, i32
  }
  func.func @transform_6(%arg0: i32) -> (i32, i32) {
    %c0_i32 = arith.constant 0 : i32
    %c0_i32_0 = arith.constant 0 : i32
    return %arg0, %c0_i32 : i32, i32
  }
}

</mosaic_0001>

<llo_original>
// kernel: tpu_custom_call.1
$region0: #{tpu_custom_call.1}
  #allocation0 [shape = 'u32[]', space=smem, size = 0x4, offset = 0x4, fixed_abs, tag = 'smem constant byte address 0x4 - core index']
  #allocation1 [shape = 'u32[144,128]{1,0:T(1,128)}', space=vmem, size = 0x12000, scoped, tag = 'internal scratch']
  %s0 = inlined_call_operand.vmem [shape: f32[16,32], index: 0, kind: input, shape index: {}]
  %s1 = inlined_call_operand.vmem [shape: f32[16,32], index: 1, kind: input, shape index: {}]
  %s2 = inlined_call_operand.vmem [shape: f32[4,32,8], index: 2, kind: input, shape index: {}]
  %s3 = inlined_call_operand.vmem [shape: f32[4,32,8], index: 3, kind: input, shape index: {}]
  %s4 = inlined_call_operand.vmem [shape: f32[4,32,8], index: 4, kind: input, shape index: {}]
  %s5 = inlined_call_operand.vmem [shape: f32[4,8,32], index: 5, kind: input, shape index: {}]
  %s6 = inlined_call_operand.hbm [shape: f32[16,32], index: 6, kind: output, shape index: {}]
  %s7 = sld [smem:[#allocation0]]
  $region57: #{tpu_custom_call.1} parent=0
    _
  %s9 = ssub.s32 1, %s7
  %s10 = scalar_select 0, %s9, %s7
  $region1: #{tpu_custom_call.1} parent=0
    #allocation2 [shape = 'u8[8192]{0}', space=vmem, size = 0x2000, scoped, tag = 'output window, operand 0']
    #allocation3 [shape = 's32[2]{0}', space=sflag, size = 0x8, scoped, tag = 'scoped memory for tpu_custom_call.1']
    %11 = vsyncpa [#allocation3], 0
    %s12 = scalar_lea.sflag [#allocation3], 1
    %13 = vsyncpa %s12, 0
    loop: start=0, step=1, limit=4
    $region2: #{tpu_custom_call.1} parent=1 // loop_pre_header
      _
    $region3: #{tpu_custom_call.1} parent=1 // loop_header
      %s15 = sphi 0, %s19
      %p16 = scmp.ge.s32.totalorder %s15, 4
      %s25 = sphi 0, %s27
      %s28 = sphi 0, %s25
      %s29 = sphi 0, %s28
      %s45 = sphi 0, %s29
      %s51 = sphi 0, %s53
      %s54 = sphi 0, %s51
      %s55 = sphi 0, %s54
      %s71 = sphi 0, %s55
      %s75 = sphi 0, %s75
      %s77 = sphi 0, %s75
      %s78 = sphi 0, %s77
      %s92 = sphi 0, %s78
      %s96 = sphi 0, %s96
      %s98 = sphi 0, %s96
      %s99 = sphi 0, %s98
      %s113 = sphi 0, %s99
      %s117 = sphi 0, %s117
      %s119 = sphi 0, %s117
      %s120 = sphi 0, %s119
      %s134 = sphi 0, %s120
      %s138 = sphi 0, %s138
      %s140 = sphi 0, %s138
      %s141 = sphi 0, %s140
      %s155 = sphi 0, %s141
      %s161 = sphi 0, %s163
      %s164 = sphi 0, %s161
      %s165 = sphi 0, %s164
      %s181 = sphi 0, %s165
    $region4: #{tpu_custom_call.1} parent=1 // loop_header_branch
      %18 = sbr.rel (%p16) target = $region8
    $region5: #{tpu_custom_call.1} parent=1 // loop_body
      %s20 = ssub.s32 %s15, 1
      %s21 = ssub.s32 %s15, 2
      %s22 = sadd.s32 %s15, 1
      %s23 = ssub.s32 %s15, %s22
      %p24 = scmp.eq.s32.totalorder %s23, 0
      %s26 = sadd.s32 %s25, 1
      %s27 = scalar_select %p24, %s25, %s26
      %p30 = pneg %p24
      %p31 = scmp.eq.s32.totalorder %s15, 1
      %p32 = por %p30, %p31
      %p33 = scmp.ne.s32.totalorder %s25, %s28
      %p34 = scmp.eq.s32.totalorder %s15, 0
      %p35 = por %p33, %p34
      %p36 = scmp.ne.s32.totalorder %s25, %s28
      %p37 = scmp.eq.s32.totalorder %s20, 1
      %p38 = por %p36, %p37
      %p39 = scmp.ne.s32.totalorder %s28, %s29
      %p40 = scmp.eq.s32.totalorder %s20, 0
      %p41 = por %p39, %p40
      %p42 = scmp.ne.s32.totalorder %s28, %s29
      %p43 = scmp.eq.s32.totalorder %s21, 1
      %p44 = por %p42, %p43
      %p46 = scmp.ne.s32.totalorder %s29, %s45
      %p47 = scmp.eq.s32.totalorder %s21, 0
      %p48 = por %p46, %p47
      %s49 = ssub.s32 %s15, %s22
      %p50 = scmp.eq.s32.totalorder %s49, 0
      %s52 = sadd.s32 %s51, 1
      %s53 = scalar_select %p50, %s51, %s52
      %p56 = pneg %p50
      %p57 = scmp.eq.s32.totalorder %s15, 1
      %p58 = por %p56, %p57
      %p59 = scmp.ne.s32.totalorder %s51, %s54
      %p60 = scmp.eq.s32.totalorder %s15, 0
      %p61 = por %p59, %p60
      %p62 = scmp.ne.s32.totalorder %s51, %s54
      %p63 = scmp.eq.s32.totalorder %s20, 1
      %p64 = por %p62, %p63
      %p65 = scmp.ne.s32.totalorder %s54, %s55
      %p66 = scmp.eq.s32.totalorder %s20, 0
      %p67 = por %p65, %p66
      %p68 = scmp.ne.s32.totalorder %s54, %s55
      %p69 = scmp.eq.s32.totalorder %s21, 1
      %p70 = por %p68, %p69
      %p72 = scmp.ne.s32.totalorder %s55, %s71
      %p73 = scmp.eq.s32.totalorder %s21, 0
      %p74 = por %p72, %p73
      %s76 = sadd.s32 %s75, 1
      %p79 = scmp.eq.s32.totalorder %s15, 1
      %p80 = scmp.ne.s32.totalorder %s75, %s77
      %p81 = scmp.eq.s32.totalorder %s15, 0
      %p82 = por %p80, %p81
      %p83 = scmp.ne.s32.totalorder %s75, %s77
      %p84 = scmp.eq.s32.totalorder %s20, 1
      %p85 = por %p83, %p84
      %p86 = scmp.ne.s32.totalorder %s77, %s78
      %p87 = scmp.eq.s32.totalorder %s20, 0
      %p88 = por %p86, %p87
      %p89 = scmp.ne.s32.totalorder %s77, %s78
      %p90 = scmp.eq.s32.totalorder %s21, 1
      %p91 = por %p89, %p90
      %p93 = scmp.ne.s32.totalorder %s78, %s92
      %p94 = scmp.eq.s32.totalorder %s21, 0
      %p95 = por %p93, %p94
      %s97 = sadd.s32 %s96, 1
      %p100 = scmp.eq.s32.totalorder %s15, 1
      %p101 = scmp.ne.s32.totalorder %s96, %s98
      %p102 = scmp.eq.s32.totalorder %s15, 0
      %p103 = por %p101, %p102
      %p104 = scmp.ne.s32.totalorder %s96, %s98
      %p105 = scmp.eq.s32.totalorder %s20, 1
      %p106 = por %p104, %p105
      %p107 = scmp.ne.s32.totalorder %s98, %s99
      %p108 = scmp.eq.s32.totalorder %s20, 0
      %p109 = por %p107, %p108
      %p110 = scmp.ne.s32.totalorder %s98, %s99
      %p111 = scmp.eq.s32.totalorder %s21, 1
      %p112 = por %p110, %p111
      %p114 = scmp.ne.s32.totalorder %s99, %s113
      %p115 = scmp.eq.s32.totalorder %s21, 0
      %p116 = por %p114, %p115
      %s118 = sadd.s32 %s117, 1
      %p121 = scmp.eq.s32.totalorder %s15, 1
      %p122 = scmp.ne.s32.totalorder %s117, %s119
      %p123 = scmp.eq.s32.totalorder %s15, 0
      %p124 = por %p122, %p123
      %p125 = scmp.ne.s32.totalorder %s117, %s119
      %p126 = scmp.eq.s32.totalorder %s20, 1
      %p127 = por %p125, %p126
      %p128 = scmp.ne.s32.totalorder %s119, %s120
      %p129 = scmp.eq.s32.totalorder %s20, 0
      %p130 = por %p128, %p129
      %p131 = scmp.ne.s32.totalorder %s119, %s120
      %p132 = scmp.eq.s32.totalorder %s21, 1
      %p133 = por %p131, %p132
      %p135 = scmp.ne.s32.totalorder %s120, %s134
      %p136 = scmp.eq.s32.totalorder %s21, 0
      %p137 = por %p135, %p136
      %s139 = sadd.s32 %s138, 1
      %p142 = scmp.eq.s32.totalorder %s15, 1
      %p143 = scmp.ne.s32.totalorder %s138, %s140
      %p144 = scmp.eq.s32.totalorder %s15, 0
      %p145 = por %p143, %p144
      %p146 = scmp.ne.s32.totalorder %s138, %s140
      %p147 = scmp.eq.s32.totalorder %s20, 1
      %p148 = por %p146, %p147
      %p149 = scmp.ne.s32.totalorder %s140, %s141
      %p150 = scmp.eq.s32.totalorder %s20, 0
      %p151 = por %p149, %p150
      %p152 = scmp.ne.s32.totalorder %s140, %s141
      %p153 = scmp.eq.s32.totalorder %s21, 1
      %p154 = por %p152, %p153
      %p156 = scmp.ne.s32.totalorder %s141, %s155
      %p157 = scmp.eq.s32.totalorder %s21, 0
      %p158 = por %p156, %p157
      %s159 = ssub.s32 %s15, %s22
      %p160 = scmp.eq.s32.totalorder %s159, 0
      %s162 = sadd.s32 %s161, 1
      %s163 = scalar_select %p160, %s161, %s162
      %p166 = pneg %p160
      %p167 = scmp.eq.s32.totalorder %s15, 1
      %p168 = por %p166, %p167
      %p169 = scmp.ne.s32.totalorder %s161, %s164
      %p170 = scmp.eq.s32.totalorder %s15, 0
      %p171 = por %p169, %p170
      %p172 = scmp.ne.s32.totalorder %s161, %s164
      %p173 = scmp.eq.s32.totalorder %s20, 1
      %p174 = por %p172, %p173
      %p175 = scmp.ne.s32.totalorder %s164, %s165
      %p176 = scmp.eq.s32.totalorder %s20, 0
      %p177 = por %p175, %p176
      %p178 = scmp.ne.s32.totalorder %s164, %s165
      %p179 = scmp.eq.s32.totalorder %s21, 1
      %p180 = por %p178, %p179
      %p182 = scmp.ne.s32.totalorder %s165, %s181
      %p183 = scmp.eq.s32.totalorder %s21, 0
      %p184 = por %p182, %p183
      %p185 = scmp.le.s32.totalorder 1, %s15
      %p186 = scmp.lt.s32.totalorder %s15, 3
      %p187 = pnand %p185, %p186
      %p188 = pneg %p187
      // Predicated region
      $region9: #{tpu_custom_call.1} parent=5 // pred_check
        _
      $region10: #{tpu_custom_call.1} parent=5 // pred_check_branch
        %190 = sbr.rel (%p187) target = $region12
      $region11: #{tpu_custom_call.1} parent=5 // pred_region
        %s191 = ssub.s32 %s15, 1
        // Predicated region
        $region13: #{tpu_custom_call.1} parent=11 // pred_check
          %p192 = pneg %p88
        $region14: #{tpu_custom_call.1} parent=11 // pred_check_branch
          %194 = sbr.rel (%p192) target = $region16
        $region15: #{tpu_custom_call.1} parent=11 // pred_region
          _
        $region16: #{tpu_custom_call.1} parent=11 // pred_fallthru
          _
        // Predicated region
        $region17: #{tpu_custom_call.1} parent=11 // pred_check
          %p195 = pneg %p109
        $region18: #{tpu_custom_call.1} parent=11 // pred_check_branch
          %197 = sbr.rel (%p195) target = $region20
        $region19: #{tpu_custom_call.1} parent=11 // pred_region
          _
        $region20: #{tpu_custom_call.1} parent=11 // pred_fallthru
          _
        // Predicated region
        $region21: #{tpu_custom_call.1} parent=11 // pred_check
          %p198 = pneg %p130
        $region22: #{tpu_custom_call.1} parent=11 // pred_check_branch
          %200 = sbr.rel (%p198) target = $region24
        $region23: #{tpu_custom_call.1} parent=11 // pred_region
          _
        $region24: #{tpu_custom_call.1} parent=11 // pred_fallthru
          _
        // Predicated region
        $region25: #{tpu_custom_call.1} parent=11 // pred_check
          %p201 = pneg %p151
        $region26: #{tpu_custom_call.1} parent=11 // pred_check_branch
          %203 = sbr.rel (%p201) target = $region28
        $region27: #{tpu_custom_call.1} parent=11 // pred_region
          _
        $region28: #{tpu_custom_call.1} parent=11 // pred_fallthru
          _
      $region12: #{tpu_custom_call.1} parent=5 // pred_fallthru
        _
      %p204 = scmp.lt.s32.totalorder %s15, 2
      // Predicated region
      $region29: #{tpu_custom_call.1} parent=5 // pred_check
        %p205 = pneg %p204
      $region30: #{tpu_custom_call.1} parent=5 // pred_check_branch
        %207 = sbr.rel (%p205) target = $region32
      $region31: #{tpu_custom_call.1} parent=5 // pred_region
        // Predicated region
        $region33: #{tpu_custom_call.1} parent=31 // pred_check
          %p208 = pneg %p35
        $region34: #{tpu_custom_call.1} parent=31 // pred_check_branch
          %210 = sbr.rel (%p208) target = $region36
        $region35: #{tpu_custom_call.1} parent=31 // pred_region
          %p211 = scmp.lt.s32.totalorder %s15, 1
          %s212 = scalar_select %p211, %s15, 1
          %s213 = smul.addr %s212, 8
          %s214 = scalar_lea.vmem %s0, %s213
        $region36: #{tpu_custom_call.1} parent=31 // pred_fallthru
          _
        // Predicated region
        $region37: #{tpu_custom_call.1} parent=31 // pred_check
          %p215 = pneg %p61
        $region38: #{tpu_custom_call.1} parent=31 // pred_check_branch
          %217 = sbr.rel (%p215) target = $region40
        $region39: #{tpu_custom_call.1} parent=31 // pred_region
          %p218 = scmp.lt.s32.totalorder %s15, 1
          %s219 = scalar_select %p218, %s15, 1
          %s220 = smul.addr %s219, 8
          %s221 = scalar_lea.vmem %s1, %s220
        $region40: #{tpu_custom_call.1} parent=31 // pred_fallthru
          _
      $region32: #{tpu_custom_call.1} parent=5 // pred_fallthru
        _
      %p222 = scmp.le.s32.totalorder 1, %s15
      %p223 = scmp.lt.s32.totalorder %s15, 3
      %p224 = pnand %p222, %p223
      %p225 = pneg %p224
      // Predicated region
      $region41: #{tpu_custom_call.1} parent=5 // pred_check
        _
      $region42: #{tpu_custom_call.1} parent=5 // pred_check_branch
        %227 = sbr.rel (%p224) target = $region44
      $region43: #{tpu_custom_call.1} parent=5 // pred_region
        %s228 = ssub.s32 %s15, 1
        %p229 = scmp.lt.s32.totalorder %s20, 1
        %s230 = scalar_select %p229, %s20, 1
        %s231 = smul.addr %s230, 8
        %s232 = scalar_lea.vmem %s0, %s231
        %p233 = pneg %p41
        %p234 = pneg %p38
        %p235 = scmp.lt.s32.totalorder %s20, 1
        %s236 = scalar_select %p235, %s20, 1
        %s237 = smul.addr %s236, 8
        %s238 = scalar_lea.vmem %s1, %s237
        %p239 = pneg %p67
        %p240 = pneg %p64
        %p241 = pneg %p88
        %p242 = pneg %p85
        %p243 = pneg %p109
        %p244 = pneg %p106
        %p245 = pneg %p130
        %p246 = pneg %p127
        %p247 = pneg %p151
        %p248 = pneg %p148
        %p249 = pneg %p177
        %p250 = pneg %p174
        %s251 = sand.u32 %s164, 1
        %s252 = scalar_lea.sflag [#allocation3], %s251
        %s253 = sand.u32 %s164, 1
        %s254 = smul.addr %s253, 8
        %s255 = scalar_lea.vmem [#allocation2], %s254
        %p256 = scmp.lt.s32.totalorder %s20, 1
        %s257 = scalar_select %p256, %s20, 1
        %s258 = smul.addr %s257, 8
        %s259 = scalar_lea.vmem %s0, %s258
        %p260 = scmp.lt.s32.totalorder %s20, 1
        %s261 = scalar_select %p260, %s20, 1
        %s262 = smul.addr %s261, 8
        %s263 = scalar_lea.vmem %s1, %s262
        %v264 = vld [vmem:[%s259] sm:$0xff]
        %v265 = vmul.f32 %v264, 0.35355338
        %v266 = vld [vmem:[%s263] sm:$0xff]
        %v267 = vld [vmem:[%s2] sm:$0xff]
        %v268 = vld [vmem:[%s2 + $0x8] sm:$0xff]
        %v269 = vld [vmem:[%s2 + $0x10] sm:$0xff]
        %v270 = vld [vmem:[%s2 + $0x18] sm:$0xff]
        %vm271 = vcmask 261120
        %v273 = vsel %vm271, %v265, 0
        %275 = vmatprep.subr.mxu0 0.0
        %276 = vmatpush1.msra.mxu0 0.0
        %277 = vmatprep.subr.mxu0 0.0
        %278 = vmatpush1.msra.mxu0 0.0
        %279 = vmatprep.subr.mxu0 0.0
        %280 = vmatpush1.msra.mxu0 0.0
        %281 = vmatprep.subr.mxu0 0.0
        %282 = vmatpush1.msra.mxu0 0.0
        %283 = vmatprep.subr.mxu0 0.0
        %284 = vmatpush1.msra.mxu0 0.0
        %285 = vmatprep.subr.mxu0 0.0
        %286 = vmatpush1.msra.mxu0 0.0
        %287 = vmatprep.subr.mxu0 0.0
        %288 = vmatpush1.msra.mxu0 0.0
        %289 = vmatprep.subr.mxu0 0.0
        %290 = vmatpush1.msra.mxu0 0.0
        %291 = vmatprep.subr.mxu0 0.0
        %292 = vmatpush1.msra.mxu0 0.0
        %293 = vmatprep.subr.mxu0 0.0
        %294 = vmatpush1.msra.mxu0 0.0
        %295 = vmatprep.subr.mxu0 0.0
        %296 = vmatpush1.msra.mxu0 0.0
        %297 = vmatprep.subr.mxu0 0.0
        %298 = vmatpush1.msra.mxu0 0.0
        %299 = vmatprep.subr.mxu0 0.0
        %300 = vmatpush1.msra.mxu0 %v270
        %301 = vmatprep.subr.mxu0 0.0
        %302 = vmatpush1.msra.mxu0 %v269
        %303 = vmatprep.subr.mxu0 0.0
        %304 = vmatpush1.msra.mxu0 %v268
        %305 = vmatprep.subr.mxu0 0.0
        %306 = vmatpush1.msra.mxu0 %v267
        %307 = vmatprep.subr.mxu0 0.0
        %308 = vmatpush2.msra.mxu0 0.0
        %309 = vmatprep.subr.mxu0 0.0
        %310 = vmatpush2.msra.mxu0 0.0
        %311 = vmatprep.subr.mxu0 0.0
        %312 = vmatpush2.msra.mxu0 0.0
        %313 = vmatprep.subr.mxu0 0.0
        %314 = vmatpush2.msra.mxu0 0.0
        %315 = vmatprep.subr.mxu0 0.0
        %316 = vmatpush2.msra.mxu0 0.0
        %317 = vmatprep.subr.mxu0 0.0
        %318 = vmatpush2.msra.mxu0 0.0
        %319 = vmatprep.subr.mxu0 0.0
        %320 = vmatpush2.msra.mxu0 0.0
        %321 = vmatprep.subr.mxu0 0.0
        %322 = vmatpush2.msra.mxu0 0.0
        %323 = vmatprep.subr.mxu0 0.0
        %324 = vmatpush2.msra.mxu0 0.0
        %325 = vmatprep.subr.mxu0 0.0
        %326 = vmatpush2.msra.mxu0 0.0
        %327 = vmatprep.subr.mxu0 0.0
        %328 = vmatpush2.msra.mxu0 0.0
        %329 = vmatprep.subr.mxu0 0.0
        %330 = vmatpush2.msra.mxu0 0.0
        %331 = vmatprep.subr.mxu0 0.0
        %332 = vmatpush2.msra.mxu0 0.0
        %333 = vmatprep.subr.mxu0 0.0
        %334 = vmatpush2.msra.mxu0 0.0
        %335 = vmatprep.subr.mxu0 0.0
        %336 = vmatpush2.msra.mxu0 0.0
        %337 = vmatprep.subr.mxu0 0.0
        %338 = vmatpush2.msra.mxu0 0.0
        %339 = vmatprep.mubr.f32.mxu0 0.0
        %340 = vmatmul.mubr.f32.gmra.mxu0 %v273
        %v341 = vpop.f32.mrf.mxu0
        %v342 = vadd.f32 0.0, %v341
        %v343 = vpop.f32.mrf.mxu0
        %344 = vdwg.mxu0
        %v345 = vld [vmem:[%s3] sm:$0xff]
        %v346 = vld [vmem:[%s3 + $0x8] sm:$0xff]
        %v347 = vld [vmem:[%s3 + $0x10] sm:$0xff]
        %v348 = vld [vmem:[%s3 + $0x18] sm:$0xff]
        %v350 = vsel %vm271, %v266, 0
        %352 = vmatprep.subr.mxu0 0.0
        %353 = vmatpush1.msra.mxu0 0.0
        %354 = vmatprep.subr.mxu0 0.0
        %355 = vmatpush1.msra.mxu0 0.0
        %356 = vmatprep.subr.mxu0 0.0
        %357 = vmatpush1.msra.mxu0 0.0
        %358 = vmatprep.subr.mxu0 0.0
        %359 = vmatpush1.msra.mxu0 0.0
        %360 = vmatprep.subr.mxu0 0.0
        %361 = vmatpush1.msra.mxu0 0.0
        %362 = vmatprep.subr.mxu0 0.0
        %363 = vmatpush1.msra.mxu0 0.0
        %364 = vmatprep.subr.mxu0 0.0
        %365 = vmatpush1.msra.mxu0 0.0
        %366 = vmatprep.subr.mxu0 0.0
        %367 = vmatpush1.msra.mxu0 0.0
        %368 = vmatprep.subr.mxu0 0.0
        %369 = vmatpush1.msra.mxu0 0.0
        %370 = vmatprep.subr.mxu0 0.0
        %371 = vmatpush1.msra.mxu0 0.0
        %372 = vmatprep.subr.mxu0 0.0
        %373 = vmatpush1.msra.mxu0 0.0
        %374 = vmatprep.subr.mxu0 0.0
        %375 = vmatpush1.msra.mxu0 0.0
        %376 = vmatprep.subr.mxu0 0.0
        %377 = vmatpush1.msra.mxu0 %v348
        %378 = vmatprep.subr.mxu0 0.0
        %379 = vmatpush1.msra.mxu0 %v347
        %380 = vmatprep.subr.mxu0 0.0
        %381 = vmatpush1.msra.mxu0 %v346
        %382 = vmatprep.subr.mxu0 0.0
        %383 = vmatpush1.msra.mxu0 %v345
        %384 = vmatprep.subr.mxu0 0.0
        %385 = vmatpush2.msra.mxu0 0.0
        %386 = vmatprep.subr.mxu0 0.0
        %387 = vmatpush2.msra.mxu0 0.0
        %388 = vmatprep.subr.mxu0 0.0
        %389 = vmatpush2.msra.mxu0 0.0
        %390 = vmatprep.subr.mxu0 0.0
        %391 = vmatpush2.msra.mxu0 0.0
        %392 = vmatprep.subr.mxu0 0.0
        %393 = vmatpush2.msra.mxu0 0.0
        %394 = vmatprep.subr.mxu0 0.0
        %395 = vmatpush2.msra.mxu0 0.0
        %396 = vmatprep.subr.mxu0 0.0
        %397 = vmatpush2.msra.mxu0 0.0
        %398 = vmatprep.subr.mxu0 0.0
        %399 = vmatpush2.msra.mxu0 0.0
        %400 = vmatprep.subr.mxu0 0.0
        %401 = vmatpush2.msra.mxu0 0.0
        %402 = vmatprep.subr.mxu0 0.0
        %403 = vmatpush2.msra.mxu0 0.0
        %404 = vmatprep.subr.mxu0 0.0
        %405 = vmatpush2.msra.mxu0 0.0
        %406 = vmatprep.subr.mxu0 0.0
        %407 = vmatpush2.msra.mxu0 0.0
        %408 = vmatprep.subr.mxu0 0.0
        %409 = vmatpush2.msra.mxu0 0.0
        %410 = vmatprep.subr.mxu0 0.0
        %411 = vmatpush2.msra.mxu0 0.0
        %412 = vmatprep.subr.mxu0 0.0
        %413 = vmatpush2.msra.mxu0 0.0
        %414 = vmatprep.subr.mxu0 0.0
        %415 = vmatpush2.msra.mxu0 0.0
        %416 = vmatprep.mubr.f32.mxu0 0.0
        %417 = vmatmul.mubr.f32.gmra.mxu0 %v350
        %v418 = vpop.f32.mrf.mxu0
        %v419 = vadd.f32 0.0, %v418
        %v420 = vpop.f32.mrf.mxu0
        %421 = vdwg.mxu0
        %v422 = vld [vmem:[%s4] sm:$0xff]
        %v423 = vld [vmem:[%s4 + $0x8] sm:$0xff]
        %v424 = vld [vmem:[%s4 + $0x10] sm:$0xff]
        %v425 = vld [vmem:[%s4 + $0x18] sm:$0xff]
        %426 = vmatprep.subr.mxu0 0.0
        %427 = vmatpush1.msra.mxu0 0.0
        %428 = vmatprep.subr.mxu0 0.0
        %429 = vmatpush1.msra.mxu0 0.0
        %430 = vmatprep.subr.mxu0 0.0
        %431 = vmatpush1.msra.mxu0 0.0
        %432 = vmatprep.subr.mxu0 0.0
        %433 = vmatpush1.msra.mxu0 0.0
        %434 = vmatprep.subr.mxu0 0.0
        %435 = vmatpush1.msra.mxu0 0.0
        %436 = vmatprep.subr.mxu0 0.0
        %437 = vmatpush1.msra.mxu0 0.0
        %438 = vmatprep.subr.mxu0 0.0
        %439 = vmatpush1.msra.mxu0 0.0
        %440 = vmatprep.subr.mxu0 0.0
        %441 = vmatpush1.msra.mxu0 0.0
        %442 = vmatprep.subr.mxu0 0.0
        %443 = vmatpush1.msra.mxu0 0.0
        %444 = vmatprep.subr.mxu0 0.0
        %445 = vmatpush1.msra.mxu0 0.0
        %446 = vmatprep.subr.mxu0 0.0
        %447 = vmatpush1.msra.mxu0 0.0
        %448 = vmatprep.subr.mxu0 0.0
        %449 = vmatpush1.msra.mxu0 0.0
        %450 = vmatprep.subr.mxu0 0.0
        %451 = vmatpush1.msra.mxu0 %v425
        %452 = vmatprep.subr.mxu0 0.0
        %453 = vmatpush1.msra.mxu0 %v424
        %454 = vmatprep.subr.mxu0 0.0
        %455 = vmatpush1.msra.mxu0 %v423
        %456 = vmatprep.subr.mxu0 0.0
        %457 = vmatpush1.msra.mxu0 %v422
        %458 = vmatprep.subr.mxu0 0.0
        %459 = vmatpush2.msra.mxu0 0.0
        %460 = vmatprep.subr.mxu0 0.0
        %461 = vmatpush2.msra.mxu0 0.0
        %462 = vmatprep.subr.mxu0 0.0
        %463 = vmatpush2.msra.mxu0 0.0
        %464 = vmatprep.subr.mxu0 0.0
        %465 = vmatpush2.msra.mxu0 0.0
        %466 = vmatprep.subr.mxu0 0.0
        %467 = vmatpush2.msra.mxu0 0.0
        %468 = vmatprep.subr.mxu0 0.0
        %469 = vmatpush2.msra.mxu0 0.0
        %470 = vmatprep.subr.mxu0 0.0
        %471 = vmatpush2.msra.mxu0 0.0
        %472 = vmatprep.subr.mxu0 0.0
        %473 = vmatpush2.msra.mxu0 0.0
        %474 = vmatprep.subr.mxu0 0.0
        %475 = vmatpush2.msra.mxu0 0.0
        %476 = vmatprep.subr.mxu0 0.0
        %477 = vmatpush2.msra.mxu0 0.0
        %478 = vmatprep.subr.mxu0 0.0
        %479 = vmatpush2.msra.mxu0 0.0
        %480 = vmatprep.subr.mxu0 0.0
        %481 = vmatpush2.msra.mxu0 0.0
        %482 = vmatprep.subr.mxu0 0.0
        %483 = vmatpush2.msra.mxu0 0.0
        %484 = vmatprep.subr.mxu0 0.0
        %485 = vmatpush2.msra.mxu0 0.0
        %486 = vmatprep.subr.mxu0 0.0
        %487 = vmatpush2.msra.mxu0 0.0
        %488 = vmatprep.subr.mxu0 0.0
        %489 = vmatpush2.msra.mxu0 0.0
        %490 = vmatprep.mubr.f32.mxu0 0.0
        %491 = vmatmul.mubr.f32.gmra.mxu0 %v350
        %v492 = vpop.f32.mrf.mxu0
        %v493 = vadd.f32 0.0, %v492
        %v494 = vpop.f32.mrf.mxu0
        %495 = vdwg.mxu0
        %vm496 = vcmask 64512
        %v498 = vsel %vm496, %v342, 0
        %v501 = vsel %vm496, %v419, 0
        %503 = vmatprep.subr.mxu0 0.0
        %504 = vmatpush1.xpose.msra.mxu0 0.0
        %505 = vmatprep.subr.mxu0 0.0
        %506 = vmatpush1.xpose.msra.mxu0 0.0
        %507 = vmatprep.subr.mxu0 0.0
        %508 = vmatpush1.xpose.msra.mxu0 0.0
        %509 = vmatprep.subr.mxu0 0.0
        %510 = vmatpush1.xpose.msra.mxu0 0.0
        %511 = vmatprep.subr.mxu0 0.0
        %512 = vmatpush1.xpose.msra.mxu0 0.0
        %513 = vmatprep.subr.mxu0 0.0
        %514 = vmatpush1.xpose.msra.mxu0 0.0
        %515 = vmatprep.subr.mxu0 0.0
        %516 = vmatpush1.xpose.msra.mxu0 0.0
        %517 = vmatprep.subr.mxu0 0.0
        %518 = vmatpush1.xpose.msra.mxu0 0.0
        %519 = vmatprep.subr.mxu0 0.0
        %520 = vmatpush1.xpose.msra.mxu0 0.0
        %521 = vmatprep.subr.mxu0 0.0
        %522 = vmatpush1.xpose.msra.mxu0 0.0
        %523 = vmatprep.subr.mxu0 0.0
        %524 = vmatpush1.xpose.msra.mxu0 0.0
        %525 = vmatprep.subr.mxu0 0.0
        %526 = vmatpush1.xpose.msra.mxu0 0.0
        %527 = vmatprep.subr.mxu0 0.0
        %528 = vmatpush1.xpose.msra.mxu0 0.0
        %529 = vmatprep.subr.mxu0 0.0
        %530 = vmatpush1.xpose.msra.mxu0 0.0
        %531 = vmatprep.subr.mxu0 0.0
        %532 = vmatpush1.xpose.msra.mxu0 0.0
        %533 = vmatprep.subr.mxu0 0.0
        %534 = vmatpush1.xpose.msra.mxu0 %v501
        %535 = vmatprep.subr.mxu0 0.0
        %536 = vmatpush2.xpose.msra.mxu0 0.0
        %537 = vmatprep.subr.mxu0 0.0
        %538 = vmatpush2.xpose.msra.mxu0 0.0
        %539 = vmatprep.subr.mxu0 0.0
        %540 = vmatpush2.xpose.msra.mxu0 0.0
        %541 = vmatprep.subr.mxu0 0.0
        %542 = vmatpush2.xpose.msra.mxu0 0.0
        %543 = vmatprep.subr.mxu0 0.0
        %544 = vmatpush2.xpose.msra.mxu0 0.0
        %545 = vmatprep.subr.mxu0 0.0
        %546 = vmatpush2.xpose.msra.mxu0 0.0
        %547 = vmatprep.subr.mxu0 0.0
        %548 = vmatpush2.xpose.msra.mxu0 0.0
        %549 = vmatprep.subr.mxu0 0.0
        %550 = vmatpush2.xpose.msra.mxu0 0.0
        %551 = vmatprep.subr.mxu0 0.0
        %552 = vmatpush2.xpose.msra.mxu0 0.0
        %553 = vmatprep.subr.mxu0 0.0
        %554 = vmatpush2.xpose.msra.mxu0 0.0
        %555 = vmatprep.subr.mxu0 0.0
        %556 = vmatpush2.xpose.msra.mxu0 0.0
        %557 = vmatprep.subr.mxu0 0.0
        %558 = vmatpush2.xpose.msra.mxu0 0.0
        %559 = vmatprep.subr.mxu0 0.0
        %560 = vmatpush2.xpose.msra.mxu0 0.0
        %561 = vmatprep.subr.mxu0 0.0
        %562 = vmatpush2.xpose.msra.mxu0 0.0
        %563 = vmatprep.subr.mxu0 0.0
        %564 = vmatpush2.xpose.msra.mxu0 0.0
        %565 = vmatprep.subr.mxu0 0.0
        %566 = vmatpush2.xpose.msra.mxu0 0.0
        %567 = vmatprep.mubr.f32.mxu0 0.0
        %568 = vmatmul.mubr.f32.gmra.mxu0 %v498
        %v569 = vpop.f32.mrf.mxu0
        %v570 = vadd.f32 0.0, %v569
        %v571 = vpop.f32.mrf.mxu0
        %572 = vdwg.mxu0
        %v573 = vsel %vm496, %v570, -inf
        %574 = vmax.xlane.f32.xlu0 %v573
        %v575 = vpop.xlane.xlu0 %574
        %v576 = vsub.f32 %v570, %v575
        %v577 = vmul.f32 %v576, 1.442695
        %v578 = vpow.pop %v577
        %v579 = vsel %vm496, %v578, 0.0
        %580 = vadd.xlane.f32.xlu0 %v579
        %v581 = vpop.xlane.xlu0 %580
        %v582 = vrcp.pop %v581
        %v583 = vmul.f32 %v578, %v582
        %v585 = vsel %vm496, %v583, 0
        %587 = vmatprep.subr.mxu0 0.0
        %588 = vmatpush1.msra.mxu0 0.0
        %589 = vmatprep.subr.mxu0 0.0
        %590 = vmatpush1.msra.mxu0 0.0
        %591 = vmatprep.subr.mxu0 0.0
        %592 = vmatpush1.msra.mxu0 0.0
        %593 = vmatprep.subr.mxu0 0.0
        %594 = vmatpush1.msra.mxu0 0.0
        %595 = vmatprep.subr.mxu0 0.0
        %596 = vmatpush1.msra.mxu0 0.0
        %597 = vmatprep.subr.mxu0 0.0
        %598 = vmatpush1.msra.mxu0 0.0
        %599 = vmatprep.subr.mxu0 0.0
        %600 = vmatpush1.msra.mxu0 0.0
        %601 = vmatprep.subr.mxu0 0.0
        %602 = vmatpush1.msra.mxu0 0.0
        %603 = vmatprep.subr.mxu0 0.0
        %604 = vmatpush1.msra.mxu0 0.0
        %605 = vmatprep.subr.mxu0 0.0
        %606 = vmatpush1.msra.mxu0 0.0
        %607 = vmatprep.subr.mxu0 0.0
        %608 = vmatpush1.msra.mxu0 0.0
        %609 = vmatprep.subr.mxu0 0.0
        %610 = vmatpush1.msra.mxu0 0.0
        %611 = vmatprep.subr.mxu0 0.0
        %612 = vmatpush1.msra.mxu0 0.0
        %613 = vmatprep.subr.mxu0 0.0
        %614 = vmatpush1.msra.mxu0 0.0
        %615 = vmatprep.subr.mxu0 0.0
        %616 = vmatpush1.msra.mxu0 0.0
        %617 = vmatprep.subr.mxu0 0.0
        %618 = vmatpush1.msra.mxu0 %v493
        %619 = vmatprep.subr.mxu0 0.0
        %620 = vmatpush2.msra.mxu0 0.0
        %621 = vmatprep.subr.mxu0 0.0
        %622 = vmatpush2.msra.mxu0 0.0
        %623 = vmatprep.subr.mxu0 0.0
        %624 = vmatpush2.msra.mxu0 0.0
        %625 = vmatprep.subr.mxu0 0.0
        %626 = vmatpush2.msra.mxu0 0.0
        %627 = vmatprep.subr.mxu0 0.0
        %628 = vmatpush2.msra.mxu0 0.0
        %629 = vmatprep.subr.mxu0 0.0
        %630 = vmatpush2.msra.mxu0 0.0
        %631 = vmatprep.subr.mxu0 0.0
        %632 = vmatpush2.msra.mxu0 0.0
        %633 = vmatprep.subr.mxu0 0.0
        %634 = vmatpush2.msra.mxu0 0.0
        %635 = vmatprep.subr.mxu0 0.0
        %636 = vmatpush2.msra.mxu0 0.0
        %637 = vmatprep.subr.mxu0 0.0
        %638 = vmatpush2.msra.mxu0 0.0
        %639 = vmatprep.subr.mxu0 0.0
        %640 = vmatpush2.msra.mxu0 0.0
        %641 = vmatprep.subr.mxu0 0.0
        %642 = vmatpush2.msra.mxu0 0.0
        %643 = vmatprep.subr.mxu0 0.0
        %644 = vmatpush2.msra.mxu0 0.0
        %645 = vmatprep.subr.mxu0 0.0
        %646 = vmatpush2.msra.mxu0 0.0
        %647 = vmatprep.subr.mxu0 0.0
        %648 = vmatpush2.msra.mxu0 0.0
        %649 = vmatprep.subr.mxu0 0.0
        %650 = vmatpush2.msra.mxu0 0.0
        %651 = vmatprep.mubr.f32.mxu0 0.0
        %652 = vmatmul.mubr.f32.gmra.mxu0 %v585
        %v653 = vpop.f32.mrf.mxu0
        %v654 = vadd.f32 0.0, %v653
        %v655 = vpop.f32.mrf.mxu0
        %656 = vdwg.mxu0
        %v657 = vld [vmem:[%s5] sm:$0xff]
        %s658 = scalar_lea.vmem %s2, 32
        %v659 = vld [vmem:[%s658] sm:$0xff]
        %v660 = vld [vmem:[%s658 + $0x8] sm:$0xff]
        %v661 = vld [vmem:[%s658 + $0x10] sm:$0xff]
        %v662 = vld [vmem:[%s658 + $0x18] sm:$0xff]
        %663 = vmatprep.subr.mxu0 0.0
        %664 = vmatpush1.msra.mxu0 0.0
        %665 = vmatprep.subr.mxu0 0.0
        %666 = vmatpush1.msra.mxu0 0.0
        %667 = vmatprep.subr.mxu0 0.0
        %668 = vmatpush1.msra.mxu0 0.0
        %669 = vmatprep.subr.mxu0 0.0
        %670 = vmatpush1.msra.mxu0 0.0
        %671 = vmatprep.subr.mxu0 0.0
        %672 = vmatpush1.msra.mxu0 0.0
        %673 = vmatprep.subr.mxu0 0.0
        %674 = vmatpush1.msra.mxu0 0.0
        %675 = vmatprep.subr.mxu0 0.0
        %676 = vmatpush1.msra.mxu0 0.0
        %677 = vmatprep.subr.mxu0 0.0
        %678 = vmatpush1.msra.mxu0 0.0
        %679 = vmatprep.subr.mxu0 0.0
        %680 = vmatpush1.msra.mxu0 0.0
        %681 = vmatprep.subr.mxu0 0.0
        %682 = vmatpush1.msra.mxu0 0.0
        %683 = vmatprep.subr.mxu0 0.0
        %684 = vmatpush1.msra.mxu0 0.0
        %685 = vmatprep.subr.mxu0 0.0
        %686 = vmatpush1.msra.mxu0 0.0
        %687 = vmatprep.subr.mxu0 0.0
        %688 = vmatpush1.msra.mxu0 %v662
        %689 = vmatprep.subr.mxu0 0.0
        %690 = vmatpush1.msra.mxu0 %v661
        %691 = vmatprep.subr.mxu0 0.0
        %692 = vmatpush1.msra.mxu0 %v660
        %693 = vmatprep.subr.mxu0 0.0
        %694 = vmatpush1.msra.mxu0 %v659
        %695 = vmatprep.subr.mxu0 0.0
        %696 = vmatpush2.msra.mxu0 0.0
        %697 = vmatprep.subr.mxu0 0.0
        %698 = vmatpush2.msra.mxu0 0.0
        %699 = vmatprep.subr.mxu0 0.0
        %700 = vmatpush2.msra.mxu0 0.0
        %701 = vmatprep.subr.mxu0 0.0
        %702 = vmatpush2.msra.mxu0 0.0
        %703 = vmatprep.subr.mxu0 0.0
        %704 = vmatpush2.msra.mxu0 0.0
        %705 = vmatprep.subr.mxu0 0.0
        %706 = vmatpush2.msra.mxu0 0.0
        %707 = vmatprep.subr.mxu0 0.0
        %708 = vmatpush2.msra.mxu0 0.0
        %709 = vmatprep.subr.mxu0 0.0
        %710 = vmatpush2.msra.mxu0 0.0
        %711 = vmatprep.subr.mxu0 0.0
        %712 = vmatpush2.msra.mxu0 0.0
        %713 = vmatprep.subr.mxu0 0.0
        %714 = vmatpush2.msra.mxu0 0.0
        %715 = vmatprep.subr.mxu0 0.0
        %716 = vmatpush2.msra.mxu0 0.0
        %717 = vmatprep.subr.mxu0 0.0
        %718 = vmatpush2.msra.mxu0 0.0
        %719 = vmatprep.subr.mxu0 0.0
        %720 = vmatpush2.msra.mxu0 0.0
        %721 = vmatprep.subr.mxu0 0.0
        %722 = vmatpush2.msra.mxu0 0.0
        %723 = vmatprep.subr.mxu0 0.0
        %724 = vmatpush2.msra.mxu0 0.0
        %725 = vmatprep.subr.mxu0 0.0
        %726 = vmatpush2.msra.mxu0 0.0
        %727 = vmatprep.mubr.f32.mxu0 0.0
        %728 = vmatmul.mubr.f32.gmra.mxu0 %v273
        %v729 = vpop.f32.mrf.mxu0
        %v730 = vadd.f32 0.0, %v729
        %v731 = vpop.f32.mrf.mxu0
        %732 = vdwg.mxu0
        %s733 = scalar_lea.vmem %s3, 32
        %v734 = vld [vmem:[%s733] sm:$0xff]
        %v735 = vld [vmem:[%s733 + $0x8] sm:$0xff]
        %v736 = vld [vmem:[%s733 + $0x10] sm:$0xff]
        %v737 = vld [vmem:[%s733 + $0x18] sm:$0xff]
        %738 = vmatprep.subr.mxu0 0.0
        %739 = vmatpush1.msra.mxu0 0.0
        %740 = vmatprep.subr.mxu0 0.0
        %741 = vmatpush1.msra.mxu0 0.0
        %742 = vmatprep.subr.mxu0 0.0
        %743 = vmatpush1.msra.mxu0 0.0
        %744 = vmatprep.subr.mxu0 0.0
        %745 = vmatpush1.msra.mxu0 0.0
        %746 = vmatprep.subr.mxu0 0.0
        %747 = vmatpush1.msra.mxu0 0.0
        %748 = vmatprep.subr.mxu0 0.0
        %749 = vmatpush1.msra.mxu0 0.0
        %750 = vmatprep.subr.mxu0 0.0
        %751 = vmatpush1.msra.mxu0 0.0
        %752 = vmatprep.subr.mxu0 0.0
        %753 = vmatpush1.msra.mxu0 0.0
        %754 = vmatprep.subr.mxu0 0.0
        %755 = vmatpush1.msra.mxu0 0.0
        %756 = vmatprep.subr.mxu0 0.0
        %757 = vmatpush1.msra.mxu0 0.0
        %758 = vmatprep.subr.mxu0 0.0
        %759 = vmatpush1.msra.mxu0 0.0
        %760 = vmatprep.subr.mxu0 0.0
        %761 = vmatpush1.msra.mxu0 0.0
        %762 = vmatprep.subr.mxu0 0.0
        %763 = vmatpush1.msra.mxu0 %v737
        %764 = vmatprep.subr.mxu0 0.0
        %765 = vmatpush1.msra.mxu0 %v736
        %766 = vmatprep.subr.mxu0 0.0
        %767 = vmatpush1.msra.mxu0 %v735
        %768 = vmatprep.subr.mxu0 0.0
        %769 = vmatpush1.msra.mxu0 %v734
        %770 = vmatprep.subr.mxu0 0.0
        %771 = vmatpush2.msra.mxu0 0.0
        %772 = vmatprep.subr.mxu0 0.0
        %773 = vmatpush2.msra.mxu0 0.0
        %774 = vmatprep.subr.mxu0 0.0
        %775 = vmatpush2.msra.mxu0 0.0
        %776 = vmatprep.subr.mxu0 0.0
        %777 = vmatpush2.msra.mxu0 0.0
        %778 = vmatprep.subr.mxu0 0.0
        %779 = vmatpush2.msra.mxu0 0.0
        %780 = vmatprep.subr.mxu0 0.0
        %781 = vmatpush2.msra.mxu0 0.0
        %782 = vmatprep.subr.mxu0 0.0
        %783 = vmatpush2.msra.mxu0 0.0
        %784 = vmatprep.subr.mxu0 0.0
        %785 = vmatpush2.msra.mxu0 0.0
        %786 = vmatprep.subr.mxu0 0.0
        %787 = vmatpush2.msra.mxu0 0.0
        %788 = vmatprep.subr.mxu0 0.0
        %789 = vmatpush2.msra.mxu0 0.0
        %790 = vmatprep.subr.mxu0 0.0
        %791 = vmatpush2.msra.mxu0 0.0
        %792 = vmatprep.subr.mxu0 0.0
        %793 = vmatpush2.msra.mxu0 0.0
        %794 = vmatprep.subr.mxu0 0.0
        %795 = vmatpush2.msra.mxu0 0.0
        %796 = vmatprep.subr.mxu0 0.0
        %797 = vmatpush2.msra.mxu0 0.0
        %798 = vmatprep.subr.mxu0 0.0
        %799 = vmatpush2.msra.mxu0 0.0
        %800 = vmatprep.subr.mxu0 0.0
        %801 = vmatpush2.msra.mxu0 0.0
        %802 = vmatprep.mubr.f32.mxu0 0.0
        %803 = vmatmul.mubr.f32.gmra.mxu0 %v350
        %v804 = vpop.f32.mrf.mxu0
        %v805 = vadd.f32 0.0, %v804
        %v806 = vpop.f32.mrf.mxu0
        %807 = vdwg.mxu0
        %s808 = scalar_lea.vmem %s4, 32
        %v809 = vld [vmem:[%s808] sm:$0xff]
        %v810 = vld [vmem:[%s808 + $0x8] sm:$0xff]
        %v811 = vld [vmem:[%s808 + $0x10] sm:$0xff]
        %v812 = vld [vmem:[%s808 + $0x18] sm:$0xff]
        %813 = vmatprep.subr.mxu0 0.0
        %814 = vmatpush1.msra.mxu0 0.0
        %815 = vmatprep.subr.mxu0 0.0
        %816 = vmatpush1.msra.mxu0 0.0
        %817 = vmatprep.subr.mxu0 0.0
        %818 = vmatpush1.msra.mxu0 0.0
        %819 = vmatprep.subr.mxu0 0.0
        %820 = vmatpush1.msra.mxu0 0.0
        %821 = vmatprep.subr.mxu0 0.0
        %822 = vmatpush1.msra.mxu0 0.0
        %823 = vmatprep.subr.mxu0 0.0
        %824 = vmatpush1.msra.mxu0 0.0
        %825 = vmatprep.subr.mxu0 0.0
        %826 = vmatpush1.msra.mxu0 0.0
        %827 = vmatprep.subr.mxu0 0.0
        %828 = vmatpush1.msra.mxu0 0.0
        %829 = vmatprep.subr.mxu0 0.0
        %830 = vmatpush1.msra.mxu0 0.0
        %831 = vmatprep.subr.mxu0 0.0
        %832 = vmatpush1.msra.mxu0 0.0
        %833 = vmatprep.subr.mxu0 0.0
        %834 = vmatpush1.msra.mxu0 0.0
        %835 = vmatprep.subr.mxu0 0.0
        %836 = vmatpush1.msra.mxu0 0.0
        %837 = vmatprep.subr.mxu0 0.0
        %838 = vmatpush1.msra.mxu0 %v812
        %839 = vmatprep.subr.mxu0 0.0
        %840 = vmatpush1.msra.mxu0 %v811
        %841 = vmatprep.subr.mxu0 0.0
        %842 = vmatpush1.msra.mxu0 %v810
        %843 = vmatprep.subr.mxu0 0.0
        %844 = vmatpush1.msra.mxu0 %v809
        %845 = vmatprep.subr.mxu0 0.0
        %846 = vmatpush2.msra.mxu0 0.0
        %847 = vmatprep.subr.mxu0 0.0
        %848 = vmatpush2.msra.mxu0 0.0
        %849 = vmatprep.subr.mxu0 0.0
        %850 = vmatpush2.msra.mxu0 0.0
        %851 = vmatprep.subr.mxu0 0.0
        %852 = vmatpush2.msra.mxu0 0.0
        %853 = vmatprep.subr.mxu0 0.0
        %854 = vmatpush2.msra.mxu0 0.0
        %855 = vmatprep.subr.mxu0 0.0
        %856 = vmatpush2.msra.mxu0 0.0
        %857 = vmatprep.subr.mxu0 0.0
        %858 = vmatpush2.msra.mxu0 0.0
        %859 = vmatprep.subr.mxu0 0.0
        %860 = vmatpush2.msra.mxu0 0.0
        %861 = vmatprep.subr.mxu0 0.0
        %862 = vmatpush2.msra.mxu0 0.0
        %863 = vmatprep.subr.mxu0 0.0
        %864 = vmatpush2.msra.mxu0 0.0
        %865 = vmatprep.subr.mxu0 0.0
        %866 = vmatpush2.msra.mxu0 0.0
        %867 = vmatprep.subr.mxu0 0.0
        %868 = vmatpush2.msra.mxu0 0.0
        %869 = vmatprep.subr.mxu0 0.0
        %870 = vmatpush2.msra.mxu0 0.0
        %871 = vmatprep.subr.mxu0 0.0
        %872 = vmatpush2.msra.mxu0 0.0
        %873 = vmatprep.subr.mxu0 0.0
        %874 = vmatpush2.msra.mxu0 0.0
        %875 = vmatprep.subr.mxu0 0.0
        %876 = vmatpush2.msra.mxu0 0.0
        %877 = vmatprep.mubr.f32.mxu0 0.0
        %878 = vmatmul.mubr.f32.gmra.mxu0 %v350
        %v879 = vpop.f32.mrf.mxu0
        %v880 = vadd.f32 0.0, %v879
        %v881 = vpop.f32.mrf.mxu0
        %882 = vdwg.mxu0
        %v884 = vsel %vm496, %v730, 0
        %v887 = vsel %vm496, %v805, 0
        %889 = vmatprep.subr.mxu0 0.0
        %890 = vmatpush1.xpose.msra.mxu0 0.0
        %891 = vmatprep.subr.mxu0 0.0
        %892 = vmatpush1.xpose.msra.mxu0 0.0
        %893 = vmatprep.subr.mxu0 0.0
        %894 = vmatpush1.xpose.msra.mxu0 0.0
        %895 = vmatprep.subr.mxu0 0.0
        %896 = vmatpush1.xpose.msra.mxu0 0.0
        %897 = vmatprep.subr.mxu0 0.0
        %898 = vmatpush1.xpose.msra.mxu0 0.0
        %899 = vmatprep.subr.mxu0 0.0
        %900 = vmatpush1.xpose.msra.mxu0 0.0
        %901 = vmatprep.subr.mxu0 0.0
        %902 = vmatpush1.xpose.msra.mxu0 0.0
        %903 = vmatprep.subr.mxu0 0.0
        %904 = vmatpush1.xpose.msra.mxu0 0.0
        %905 = vmatprep.subr.mxu0 0.0
        %906 = vmatpush1.xpose.msra.mxu0 0.0
        %907 = vmatprep.subr.mxu0 0.0
        %908 = vmatpush1.xpose.msra.mxu0 0.0
        %909 = vmatprep.subr.mxu0 0.0
        %910 = vmatpush1.xpose.msra.mxu0 0.0
        %911 = vmatprep.subr.mxu0 0.0
        %912 = vmatpush1.xpose.msra.mxu0 0.0
        %913 = vmatprep.subr.mxu0 0.0
        %914 = vmatpush1.xpose.msra.mxu0 0.0
        %915 = vmatprep.subr.mxu0 0.0
        %916 = vmatpush1.xpose.msra.mxu0 0.0
        %917 = vmatprep.subr.mxu0 0.0
        %918 = vmatpush1.xpose.msra.mxu0 0.0
        %919 = vmatprep.subr.mxu0 0.0
        %920 = vmatpush1.xpose.msra.mxu0 %v887
        %921 = vmatprep.subr.mxu0 0.0
        %922 = vmatpush2.xpose.msra.mxu0 0.0
        %923 = vmatprep.subr.mxu0 0.0
        %924 = vmatpush2.xpose.msra.mxu0 0.0
        %925 = vmatprep.subr.mxu0 0.0
        %926 = vmatpush2.xpose.msra.mxu0 0.0
        %927 = vmatprep.subr.mxu0 0.0
        %928 = vmatpush2.xpose.msra.mxu0 0.0
        %929 = vmatprep.subr.mxu0 0.0
        %930 = vmatpush2.xpose.msra.mxu0 0.0
        %931 = vmatprep.subr.mxu0 0.0
        %932 = vmatpush2.xpose.msra.mxu0 0.0
        %933 = vmatprep.subr.mxu0 0.0
        %934 = vmatpush2.xpose.msra.mxu0 0.0
        %935 = vmatprep.subr.mxu0 0.0
        %936 = vmatpush2.xpose.msra.mxu0 0.0
        %937 = vmatprep.subr.mxu0 0.0
        %938 = vmatpush2.xpose.msra.mxu0 0.0
        %939 = vmatprep.subr.mxu0 0.0
        %940 = vmatpush2.xpose.msra.mxu0 0.0
        %941 = vmatprep.subr.mxu0 0.0
        %942 = vmatpush2.xpose.msra.mxu0 0.0
        %943 = vmatprep.subr.mxu0 0.0
        %944 = vmatpush2.xpose.msra.mxu0 0.0
        %945 = vmatprep.subr.mxu0 0.0
        %946 = vmatpush2.xpose.msra.mxu0 0.0
        %947 = vmatprep.subr.mxu0 0.0
        %948 = vmatpush2.xpose.msra.mxu0 0.0
        %949 = vmatprep.subr.mxu0 0.0
        %950 = vmatpush2.xpose.msra.mxu0 0.0
        %951 = vmatprep.subr.mxu0 0.0
        %952 = vmatpush2.xpose.msra.mxu0 0.0
        %953 = vmatprep.mubr.f32.mxu0 0.0
        %954 = vmatmul.mubr.f32.gmra.mxu0 %v884
        %v955 = vpop.f32.mrf.mxu0
        %v956 = vadd.f32 0.0, %v955
        %v957 = vpop.f32.mrf.mxu0
        %958 = vdwg.mxu0
        %v959 = vsel %vm496, %v956, -inf
        %960 = vmax.xlane.f32.xlu0 %v959
        %v961 = vpop.xlane.xlu0 %960
        %v962 = vsub.f32 %v956, %v961
        %v963 = vmul.f32 %v962, 1.442695
        %v964 = vpow.pop %v963
        %v965 = vsel %vm496, %v964, 0.0
        %966 = vadd.xlane.f32.xlu0 %v965
        %v967 = vpop.xlane.xlu0 %966
        %v968 = vrcp.pop %v967
        %v969 = vmul.f32 %v964, %v968
        %v971 = vsel %vm496, %v969, 0
        %973 = vmatprep.subr.mxu0 0.0
        %974 = vmatpush1.msra.mxu0 0.0
        %975 = vmatprep.subr.mxu0 0.0
        %976 = vmatpush1.msra.mxu0 0.0
        %977 = vmatprep.subr.mxu0 0.0
        %978 = vmatpush1.msra.mxu0 0.0
        %979 = vmatprep.subr.mxu0 0.0
        %980 = vmatpush1.msra.mxu0 0.0
        %981 = vmatprep.subr.mxu0 0.0
        %982 = vmatpush1.msra.mxu0 0.0
        %983 = vmatprep.subr.mxu0 0.0
        %984 = vmatpush1.msra.mxu0 0.0
        %985 = vmatprep.subr.mxu0 0.0
        %986 = vmatpush1.msra.mxu0 0.0
        %987 = vmatprep.subr.mxu0 0.0
        %988 = vmatpush1.msra.mxu0 0.0
        %989 = vmatprep.subr.mxu0 0.0
        %990 = vmatpush1.msra.mxu0 0.0
        %991 = vmatprep.subr.mxu0 0.0
        %992 = vmatpush1.msra.mxu0 0.0
        %993 = vmatprep.subr.mxu0 0.0
        %994 = vmatpush1.msra.mxu0 0.0
        %995 = vmatprep.subr.mxu0 0.0
        %996 = vmatpush1.msra.mxu0 0.0
        %997 = vmatprep.subr.mxu0 0.0
        %998 = vmatpush1.msra.mxu0 0.0
        %999 = vmatprep.subr.mxu0 0.0
        %1000 = vmatpush1.msra.mxu0 0.0
        %1001 = vmatprep.subr.mxu0 0.0
        %1002 = vmatpush1.msra.mxu0 0.0
        %1003 = vmatprep.subr.mxu0 0.0
        %1004 = vmatpush1.msra.mxu0 %v880
        %1005 = vmatprep.subr.mxu0 0.0
        %1006 = vmatpush2.msra.mxu0 0.0
        %1007 = vmatprep.subr.mxu0 0.0
        %1008 = vmatpush2.msra.mxu0 0.0
        %1009 = vmatprep.subr.mxu0 0.0
        %1010 = vmatpush2.msra.mxu0 0.0
        %1011 = vmatprep.subr.mxu0 0.0
        %1012 = vmatpush2.msra.mxu0 0.0
        %1013 = vmatprep.subr.mxu0 0.0
        %1014 = vmatpush2.msra.mxu0 0.0
        %1015 = vmatprep.subr.mxu0 0.0
        %1016 = vmatpush2.msra.mxu0 0.0
        %1017 = vmatprep.subr.mxu0 0.0
        %1018 = vmatpush2.msra.mxu0 0.0
        %1019 = vmatprep.subr.mxu0 0.0
        %1020 = vmatpush2.msra.mxu0 0.0
        %1021 = vmatprep.subr.mxu0 0.0
        %1022 = vmatpush2.msra.mxu0 0.0
        %1023 = vmatprep.subr.mxu0 0.0
        %1024 = vmatpush2.msra.mxu0 0.0
        %1025 = vmatprep.subr.mxu0 0.0
        %1026 = vmatpush2.msra.mxu0 0.0
        %1027 = vmatprep.subr.mxu0 0.0
        %1028 = vmatpush2.msra.mxu0 0.0
        %1029 = vmatprep.subr.mxu0 0.0
        %1030 = vmatpush2.msra.mxu0 0.0
        %1031 = vmatprep.subr.mxu0 0.0
        %1032 = vmatpush2.msra.mxu0 0.0
        %1033 = vmatprep.subr.mxu0 0.0
        %1034 = vmatpush2.msra.mxu0 0.0
        %1035 = vmatprep.subr.mxu0 0.0
        %1036 = vmatpush2.msra.mxu0 0.0
        %1037 = vmatprep.mubr.f32.mxu0 0.0
        %1038 = vmatmul.mubr.f32.gmra.mxu0 %v971
        %v1039 = vpop.f32.mrf.mxu0
        %v1040 = vadd.f32 0.0, %v1039
        %v1041 = vpop.f32.mrf.mxu0
        %1042 = vdwg.mxu0
        %s1043 = scalar_lea.vmem %s5, 8
        %v1044 = vld [vmem:[%s1043] sm:$0xff]
        %v1046 = vsel %vm496, %v1040, 0
        %1048 = vmatprep.subr.mxu0 0.0
        %1049 = vmatpush1.msra.mxu0 0.0
        %1050 = vmatprep.subr.mxu0 0.0
        %1051 = vmatpush1.msra.mxu0 0.0
        %1052 = vmatprep.subr.mxu0 0.0
        %1053 = vmatpush1.msra.mxu0 0.0
        %1054 = vmatprep.subr.mxu0 0.0
        %1055 = vmatpush1.msra.mxu0 0.0
        %1056 = vmatprep.subr.mxu0 0.0
        %1057 = vmatpush1.msra.mxu0 0.0
        %1058 = vmatprep.subr.mxu0 0.0
        %1059 = vmatpush1.msra.mxu0 0.0
        %1060 = vmatprep.subr.mxu0 0.0
        %1061 = vmatpush1.msra.mxu0 0.0
        %1062 = vmatprep.subr.mxu0 0.0
        %1063 = vmatpush1.msra.mxu0 0.0
        %1064 = vmatprep.subr.mxu0 0.0
        %1065 = vmatpush1.msra.mxu0 0.0
        %1066 = vmatprep.subr.mxu0 0.0
        %1067 = vmatpush1.msra.mxu0 0.0
        %1068 = vmatprep.subr.mxu0 0.0
        %1069 = vmatpush1.msra.mxu0 0.0
        %1070 = vmatprep.subr.mxu0 0.0
        %1071 = vmatpush1.msra.mxu0 0.0
        %1072 = vmatprep.subr.mxu0 0.0
        %1073 = vmatpush1.msra.mxu0 0.0
        %1074 = vmatprep.subr.mxu0 0.0
        %1075 = vmatpush1.msra.mxu0 0.0
        %1076 = vmatprep.subr.mxu0 0.0
        %1077 = vmatpush1.msra.mxu0 0.0
        %1078 = vmatprep.subr.mxu0 0.0
        %1079 = vmatpush1.msra.mxu0 %v1044
        %1080 = vmatprep.subr.mxu0 0.0
        %1081 = vmatpush2.msra.mxu0 0.0
        %1082 = vmatprep.subr.mxu0 0.0
        %1083 = vmatpush2.msra.mxu0 0.0
        %1084 = vmatprep.subr.mxu0 0.0
        %1085 = vmatpush2.msra.mxu0 0.0
        %1086 = vmatprep.subr.mxu0 0.0
        %1087 = vmatpush2.msra.mxu0 0.0
        %1088 = vmatprep.subr.mxu0 0.0
        %1089 = vmatpush2.msra.mxu0 0.0
        %1090 = vmatprep.subr.mxu0 0.0
        %1091 = vmatpush2.msra.mxu0 0.0
        %1092 = vmatprep.subr.mxu0 0.0
        %1093 = vmatpush2.msra.mxu0 0.0
        %1094 = vmatprep.subr.mxu0 0.0
        %1095 = vmatpush2.msra.mxu0 0.0
        %1096 = vmatprep.subr.mxu0 0.0
        %1097 = vmatpush2.msra.mxu0 0.0
        %1098 = vmatprep.subr.mxu0 0.0
        %1099 = vmatpush2.msra.mxu0 0.0
        %1100 = vmatprep.subr.mxu0 0.0
        %1101 = vmatpush2.msra.mxu0 0.0
        %1102 = vmatprep.subr.mxu0 0.0
        %1103 = vmatpush2.msra.mxu0 0.0
        %1104 = vmatprep.subr.mxu0 0.0
        %1105 = vmatpush2.msra.mxu0 0.0
        %1106 = vmatprep.subr.mxu0 0.0
        %1107 = vmatpush2.msra.mxu0 0.0
        %1108 = vmatprep.subr.mxu0 0.0
        %1109 = vmatpush2.msra.mxu0 0.0
        %1110 = vmatprep.subr.mxu0 0.0
        %1111 = vmatpush2.msra.mxu0 0.0
        %1112 = vmatprep.mubr.f32.mxu0 0.0
        %1113 = vmatmul.mubr.f32.gmra.mxu0 %v1046
        %v1114 = vpop.f32.mrf.mxu0
        %v1115 = vadd.f32 0.0, %v1114
        %v1116 = vpop.f32.mrf.mxu0
        %1117 = vdwg.mxu0
        %v1119 = vsel %vm496, %v654, 0
        %1121 = vmatprep.subr.mxu0 0.0
        %1122 = vmatpush1.msra.mxu0 0.0
        %1123 = vmatprep.subr.mxu0 0.0
        %1124 = vmatpush1.msra.mxu0 0.0
        %1125 = vmatprep.subr.mxu0 0.0
        %1126 = vmatpush1.msra.mxu0 0.0
        %1127 = vmatprep.subr.mxu0 0.0
        %1128 = vmatpush1.msra.mxu0 0.0
        %1129 = vmatprep.subr.mxu0 0.0
        %1130 = vmatpush1.msra.mxu0 0.0
        %1131 = vmatprep.subr.mxu0 0.0
        %1132 = vmatpush1.msra.mxu0 0.0
        %1133 = vmatprep.subr.mxu0 0.0
        %1134 = vmatpush1.msra.mxu0 0.0
        %1135 = vmatprep.subr.mxu0 0.0
        %1136 = vmatpush1.msra.mxu0 0.0
        %1137 = vmatprep.subr.mxu0 0.0
        %1138 = vmatpush1.msra.mxu0 0.0
        %1139 = vmatprep.subr.mxu0 0.0
        %1140 = vmatpush1.msra.mxu0 0.0
        %1141 = vmatprep.subr.mxu0 0.0
        %1142 = vmatpush1.msra.mxu0 0.0
        %1143 = vmatprep.subr.mxu0 0.0
        %1144 = vmatpush1.msra.mxu0 0.0
        %1145 = vmatprep.subr.mxu0 0.0
        %1146 = vmatpush1.msra.mxu0 0.0
        %1147 = vmatprep.subr.mxu0 0.0
        %1148 = vmatpush1.msra.mxu0 0.0
        %1149 = vmatprep.subr.mxu0 0.0
        %1150 = vmatpush1.msra.mxu0 0.0
        %1151 = vmatprep.subr.mxu0 0.0
        %1152 = vmatpush1.msra.mxu0 %v657
        %1153 = vmatprep.subr.mxu0 0.0
        %1154 = vmatpush2.msra.mxu0 0.0
        %1155 = vmatprep.subr.mxu0 0.0
        %1156 = vmatpush2.msra.mxu0 0.0
        %1157 = vmatprep.subr.mxu0 0.0
        %1158 = vmatpush2.msra.mxu0 0.0
        %1159 = vmatprep.subr.mxu0 0.0
        %1160 = vmatpush2.msra.mxu0 0.0
        %1161 = vmatprep.subr.mxu0 0.0
        %1162 = vmatpush2.msra.mxu0 0.0
        %1163 = vmatprep.subr.mxu0 0.0
        %1164 = vmatpush2.msra.mxu0 0.0
        %1165 = vmatprep.subr.mxu0 0.0
        %1166 = vmatpush2.msra.mxu0 0.0
        %1167 = vmatprep.subr.mxu0 0.0
        %1168 = vmatpush2.msra.mxu0 0.0
        %1169 = vmatprep.subr.mxu0 0.0
        %1170 = vmatpush2.msra.mxu0 0.0
        %1171 = vmatprep.subr.mxu0 0.0
        %1172 = vmatpush2.msra.mxu0 0.0
        %1173 = vmatprep.subr.mxu0 0.0
        %1174 = vmatpush2.msra.mxu0 0.0
        %1175 = vmatprep.subr.mxu0 0.0
        %1176 = vmatpush2.msra.mxu0 0.0
        %1177 = vmatprep.subr.mxu0 0.0
        %1178 = vmatpush2.msra.mxu0 0.0
        %1179 = vmatprep.subr.mxu0 0.0
        %1180 = vmatpush2.msra.mxu0 0.0
        %1181 = vmatprep.subr.mxu0 0.0
        %1182 = vmatpush2.msra.mxu0 0.0
        %1183 = vmatprep.subr.mxu0 0.0
        %1184 = vmatpush2.msra.mxu0 0.0
        %1185 = vmatprep.mubr.f32.mxu0 0.0
        %1186 = vmatmul.mubr.f32.gmra.mxu0 %v1119
        %v1187 = vpop.f32.mrf.mxu0
        %v1188 = vadd.f32 %v1115, %v1187
        %v1189 = vpop.f32.mrf.mxu0
        %1190 = vdwg.mxu0
        %s1191 = scalar_lea.vmem %s2, 64
        %v1192 = vld [vmem:[%s1191] sm:$0xff]
        %v1193 = vld [vmem:[%s1191 + $0x8] sm:$0xff]
        %v1194 = vld [vmem:[%s1191 + $0x10] sm:$0xff]
        %v1195 = vld [vmem:[%s1191 + $0x18] sm:$0xff]
        %1196 = vmatprep.subr.mxu0 0.0
        %1197 = vmatpush1.msra.mxu0 0.0
        %1198 = vmatprep.subr.mxu0 0.0
        %1199 = vmatpush1.msra.mxu0 0.0
        %1200 = vmatprep.subr.mxu0 0.0
        %1201 = vmatpush1.msra.mxu0 0.0
        %1202 = vmatprep.subr.mxu0 0.0
        %1203 = vmatpush1.msra.mxu0 0.0
        %1204 = vmatprep.subr.mxu0 0.0
        %1205 = vmatpush1.msra.mxu0 0.0
        %1206 = vmatprep.subr.mxu0 0.0
        %1207 = vmatpush1.msra.mxu0 0.0
        %1208 = vmatprep.subr.mxu0 0.0
        %1209 = vmatpush1.msra.mxu0 0.0
        %1210 = vmatprep.subr.mxu0 0.0
        %1211 = vmatpush1.msra.mxu0 0.0
        %1212 = vmatprep.subr.mxu0 0.0
        %1213 = vmatpush1.msra.mxu0 0.0
        %1214 = vmatprep.subr.mxu0 0.0
        %1215 = vmatpush1.msra.mxu0 0.0
        %1216 = vmatprep.subr.mxu0 0.0
        %1217 = vmatpush1.msra.mxu0 0.0
        %1218 = vmatprep.subr.mxu0 0.0
        %1219 = vmatpush1.msra.mxu0 0.0
        %1220 = vmatprep.subr.mxu0 0.0
        %1221 = vmatpush1.msra.mxu0 %v1195
        %1222 = vmatprep.subr.mxu0 0.0
        %1223 = vmatpush1.msra.mxu0 %v1194
        %1224 = vmatprep.subr.mxu0 0.0
        %1225 = vmatpush1.msra.mxu0 %v1193
        %1226 = vmatprep.subr.mxu0 0.0
        %1227 = vmatpush1.msra.mxu0 %v1192
        %1228 = vmatprep.subr.mxu0 0.0
        %1229 = vmatpush2.msra.mxu0 0.0
        %1230 = vmatprep.subr.mxu0 0.0
        %1231 = vmatpush2.msra.mxu0 0.0
        %1232 = vmatprep.subr.mxu0 0.0
        %1233 = vmatpush2.msra.mxu0 0.0
        %1234 = vmatprep.subr.mxu0 0.0
        %1235 = vmatpush2.msra.mxu0 0.0
        %1236 = vmatprep.subr.mxu0 0.0
        %1237 = vmatpush2.msra.mxu0 0.0
        %1238 = vmatprep.subr.mxu0 0.0
        %1239 = vmatpush2.msra.mxu0 0.0
        %1240 = vmatprep.subr.mxu0 0.0
        %1241 = vmatpush2.msra.mxu0 0.0
        %1242 = vmatprep.subr.mxu0 0.0
        %1243 = vmatpush2.msra.mxu0 0.0
        %1244 = vmatprep.subr.mxu0 0.0
        %1245 = vmatpush2.msra.mxu0 0.0
        %1246 = vmatprep.subr.mxu0 0.0
        %1247 = vmatpush2.msra.mxu0 0.0
        %1248 = vmatprep.subr.mxu0 0.0
        %1249 = vmatpush2.msra.mxu0 0.0
        %1250 = vmatprep.subr.mxu0 0.0
        %1251 = vmatpush2.msra.mxu0 0.0
        %1252 = vmatprep.subr.mxu0 0.0
        %1253 = vmatpush2.msra.mxu0 0.0
        %1254 = vmatprep.subr.mxu0 0.0
        %1255 = vmatpush2.msra.mxu0 0.0
        %1256 = vmatprep.subr.mxu0 0.0
        %1257 = vmatpush2.msra.mxu0 0.0
        %1258 = vmatprep.subr.mxu0 0.0
        %1259 = vmatpush2.msra.mxu0 0.0
        %1260 = vmatprep.mubr.f32.mxu0 0.0
        %1261 = vmatmul.mubr.f32.gmra.mxu0 %v273
        %v1262 = vpop.f32.mrf.mxu0
        %v1263 = vadd.f32 0.0, %v1262
        %v1264 = vpop.f32.mrf.mxu0
        %1265 = vdwg.mxu0
        %s1266 = scalar_lea.vmem %s3, 64
        %v1267 = vld [vmem:[%s1266] sm:$0xff]
        %v1268 = vld [vmem:[%s1266 + $0x8] sm:$0xff]
        %v1269 = vld [vmem:[%s1266 + $0x10] sm:$0xff]
        %v1270 = vld [vmem:[%s1266 + $0x18] sm:$0xff]
        %1271 = vmatprep.subr.mxu0 0.0
        %1272 = vmatpush1.msra.mxu0 0.0
        %1273 = vmatprep.subr.mxu0 0.0
        %1274 = vmatpush1.msra.mxu0 0.0
        %1275 = vmatprep.subr.mxu0 0.0
        %1276 = vmatpush1.msra.mxu0 0.0
        %1277 = vmatprep.subr.mxu0 0.0
        %1278 = vmatpush1.msra.mxu0 0.0
        %1279 = vmatprep.subr.mxu0 0.0
        %1280 = vmatpush1.msra.mxu0 0.0
        %1281 = vmatprep.subr.mxu0 0.0
        %1282 = vmatpush1.msra.mxu0 0.0
        %1283 = vmatprep.subr.mxu0 0.0
        %1284 = vmatpush1.msra.mxu0 0.0
        %1285 = vmatprep.subr.mxu0 0.0
        %1286 = vmatpush1.msra.mxu0 0.0
        %1287 = vmatprep.subr.mxu0 0.0
        %1288 = vmatpush1.msra.mxu0 0.0
        %1289 = vmatprep.subr.mxu0 0.0
        %1290 = vmatpush1.msra.mxu0 0.0
        %1291 = vmatprep.subr.mxu0 0.0
        %1292 = vmatpush1.msra.mxu0 0.0
        %1293 = vmatprep.subr.mxu0 0.0
        %1294 = vmatpush1.msra.mxu0 0.0
        %1295 = vmatprep.subr.mxu0 0.0
        %1296 = vmatpush1.msra.mxu0 %v1270
        %1297 = vmatprep.subr.mxu0 0.0
        %1298 = vmatpush1.msra.mxu0 %v1269
        %1299 = vmatprep.subr.mxu0 0.0
        %1300 = vmatpush1.msra.mxu0 %v1268
        %1301 = vmatprep.subr.mxu0 0.0
        %1302 = vmatpush1.msra.mxu0 %v1267
        %1303 = vmatprep.subr.mxu0 0.0
        %1304 = vmatpush2.msra.mxu0 0.0
        %1305 = vmatprep.subr.mxu0 0.0
        %1306 = vmatpush2.msra.mxu0 0.0
        %1307 = vmatprep.subr.mxu0 0.0
        %1308 = vmatpush2.msra.mxu0 0.0
        %1309 = vmatprep.subr.mxu0 0.0
        %1310 = vmatpush2.msra.mxu0 0.0
        %1311 = vmatprep.subr.mxu0 0.0
        %1312 = vmatpush2.msra.mxu0 0.0
        %1313 = vmatprep.subr.mxu0 0.0
        %1314 = vmatpush2.msra.mxu0 0.0
        %1315 = vmatprep.subr.mxu0 0.0
        %1316 = vmatpush2.msra.mxu0 0.0
        %1317 = vmatprep.subr.mxu0 0.0
        %1318 = vmatpush2.msra.mxu0 0.0
        %1319 = vmatprep.subr.mxu0 0.0
        %1320 = vmatpush2.msra.mxu0 0.0
        %1321 = vmatprep.subr.mxu0 0.0
        %1322 = vmatpush2.msra.mxu0 0.0
        %1323 = vmatprep.subr.mxu0 0.0
        %1324 = vmatpush2.msra.mxu0 0.0
        %1325 = vmatprep.subr.mxu0 0.0
        %1326 = vmatpush2.msra.mxu0 0.0
        %1327 = vmatprep.subr.mxu0 0.0
        %1328 = vmatpush2.msra.mxu0 0.0
        %1329 = vmatprep.subr.mxu0 0.0
        %1330 = vmatpush2.msra.mxu0 0.0
        %1331 = vmatprep.subr.mxu0 0.0
        %1332 = vmatpush2.msra.mxu0 0.0
        %1333 = vmatprep.subr.mxu0 0.0
        %1334 = vmatpush2.msra.mxu0 0.0
        %1335 = vmatprep.mubr.f32.mxu0 0.0
        %1336 = vmatmul.mubr.f32.gmra.mxu0 %v350
        %v1337 = vpop.f32.mrf.mxu0
        %v1338 = vadd.f32 0.0, %v1337
        %v1339 = vpop.f32.mrf.mxu0
        %1340 = vdwg.mxu0
        %s1341 = scalar_lea.vmem %s4, 64
        %v1342 = vld [vmem:[%s1341] sm:$0xff]
        %v1343 = vld [vmem:[%s1341 + $0x8] sm:$0xff]
        %v1344 = vld [vmem:[%s1341 + $0x10] sm:$0xff]
        %v1345 = vld [vmem:[%s1341 + $0x18] sm:$0xff]
        %1346 = vmatprep.subr.mxu0 0.0
        %1347 = vmatpush1.msra.mxu0 0.0
        %1348 = vmatprep.subr.mxu0 0.0
        %1349 = vmatpush1.msra.mxu0 0.0
        %1350 = vmatprep.subr.mxu0 0.0
        %1351 = vmatpush1.msra.mxu0 0.0
        %1352 = vmatprep.subr.mxu0 0.0
        %1353 = vmatpush1.msra.mxu0 0.0
        %1354 = vmatprep.subr.mxu0 0.0
        %1355 = vmatpush1.msra.mxu0 0.0
        %1356 = vmatprep.subr.mxu0 0.0
        %1357 = vmatpush1.msra.mxu0 0.0
        %1358 = vmatprep.subr.mxu0 0.0
        %1359 = vmatpush1.msra.mxu0 0.0
        %1360 = vmatprep.subr.mxu0 0.0
        %1361 = vmatpush1.msra.mxu0 0.0
        %1362 = vmatprep.subr.mxu0 0.0
        %1363 = vmatpush1.msra.mxu0 0.0
        %1364 = vmatprep.subr.mxu0 0.0
        %1365 = vmatpush1.msra.mxu0 0.0
        %1366 = vmatprep.subr.mxu0 0.0
        %1367 = vmatpush1.msra.mxu0 0.0
        %1368 = vmatprep.subr.mxu0 0.0
        %1369 = vmatpush1.msra.mxu0 0.0
        %1370 = vmatprep.subr.mxu0 0.0
        %1371 = vmatpush1.msra.mxu0 %v1345
        %1372 = vmatprep.subr.mxu0 0.0
        %1373 = vmatpush1.msra.mxu0 %v1344
        %1374 = vmatprep.subr.mxu0 0.0
        %1375 = vmatpush1.msra.mxu0 %v1343
        %1376 = vmatprep.subr.mxu0 0.0
        %1377 = vmatpush1.msra.mxu0 %v1342
        %1378 = vmatprep.subr.mxu0 0.0
        %1379 = vmatpush2.msra.mxu0 0.0
        %1380 = vmatprep.subr.mxu0 0.0
        %1381 = vmatpush2.msra.mxu0 0.0
        %1382 = vmatprep.subr.mxu0 0.0
        %1383 = vmatpush2.msra.mxu0 0.0
        %1384 = vmatprep.subr.mxu0 0.0
        %1385 = vmatpush2.msra.mxu0 0.0
        %1386 = vmatprep.subr.mxu0 0.0
        %1387 = vmatpush2.msra.mxu0 0.0
        %1388 = vmatprep.subr.mxu0 0.0
        %1389 = vmatpush2.msra.mxu0 0.0
        %1390 = vmatprep.subr.mxu0 0.0
        %1391 = vmatpush2.msra.mxu0 0.0
        %1392 = vmatprep.subr.mxu0 0.0
        %1393 = vmatpush2.msra.mxu0 0.0
        %1394 = vmatprep.subr.mxu0 0.0
        %1395 = vmatpush2.msra.mxu0 0.0
        %1396 = vmatprep.subr.mxu0 0.0
        %1397 = vmatpush2.msra.mxu0 0.0
        %1398 = vmatprep.subr.mxu0 0.0
        %1399 = vmatpush2.msra.mxu0 0.0
        %1400 = vmatprep.subr.mxu0 0.0
        %1401 = vmatpush2.msra.mxu0 0.0
        %1402 = vmatprep.subr.mxu0 0.0
        %1403 = vmatpush2.msra.mxu0 0.0
        %1404 = vmatprep.subr.mxu0 0.0
        %1405 = vmatpush2.msra.mxu0 0.0
        %1406 = vmatprep.subr.mxu0 0.0
        %1407 = vmatpush2.msra.mxu0 0.0
        %1408 = vmatprep.subr.mxu0 0.0
        %1409 = vmatpush2.msra.mxu0 0.0
        %1410 = vmatprep.mubr.f32.mxu0 0.0
        %1411 = vmatmul.mubr.f32.gmra.mxu0 %v350
        %v1412 = vpop.f32.mrf.mxu0
        %v1413 = vadd.f32 0.0, %v1412
        %v1414 = vpop.f32.mrf.mxu0
        %1415 = vdwg.mxu0
        %v1417 = vsel %vm496, %v1263, 0
        %v1420 = vsel %vm496, %v1338, 0
        %1422 = vmatprep.subr.mxu0 0.0
        %1423 = vmatpush1.xpose.msra.mxu0 0.0
        %1424 = vmatprep.subr.mxu0 0.0
        %1425 = vmatpush1.xpose.msra.mxu0 0.0
        %1426 = vmatprep.subr.mxu0 0.0
        %1427 = vmatpush1.xpose.msra.mxu0 0.0
        %1428 = vmatprep.subr.mxu0 0.0
        %1429 = vmatpush1.xpose.msra.mxu0 0.0
        %1430 = vmatprep.subr.mxu0 0.0
        %1431 = vmatpush1.xpose.msra.mxu0 0.0
        %1432 = vmatprep.subr.mxu0 0.0
        %1433 = vmatpush1.xpose.msra.mxu0 0.0
        %1434 = vmatprep.subr.mxu0 0.0
        %1435 = vmatpush1.xpose.msra.mxu0 0.0
        %1436 = vmatprep.subr.mxu0 0.0
        %1437 = vmatpush1.xpose.msra.mxu0 0.0
        %1438 = vmatprep.subr.mxu0 0.0
        %1439 = vmatpush1.xpose.msra.mxu0 0.0
        %1440 = vmatprep.subr.mxu0 0.0
        %1441 = vmatpush1.xpose.msra.mxu0 0.0
        %1442 = vmatprep.subr.mxu0 0.0
        %1443 = vmatpush1.xpose.msra.mxu0 0.0
        %1444 = vmatprep.subr.mxu0 0.0
        %1445 = vmatpush1.xpose.msra.mxu0 0.0
        %1446 = vmatprep.subr.mxu0 0.0
        %1447 = vmatpush1.xpose.msra.mxu0 0.0
        %1448 = vmatprep.subr.mxu0 0.0
        %1449 = vmatpush1.xpose.msra.mxu0 0.0
        %1450 = vmatprep.subr.mxu0 0.0
        %1451 = vmatpush1.xpose.msra.mxu0 0.0
        %1452 = vmatprep.subr.mxu0 0.0
        %1453 = vmatpush1.xpose.msra.mxu0 %v1420
        %1454 = vmatprep.subr.mxu0 0.0
        %1455 = vmatpush2.xpose.msra.mxu0 0.0
        %1456 = vmatprep.subr.mxu0 0.0
        %1457 = vmatpush2.xpose.msra.mxu0 0.0
        %1458 = vmatprep.subr.mxu0 0.0
        %1459 = vmatpush2.xpose.msra.mxu0 0.0
        %1460 = vmatprep.subr.mxu0 0.0
        %1461 = vmatpush2.xpose.msra.mxu0 0.0
        %1462 = vmatprep.subr.mxu0 0.0
        %1463 = vmatpush2.xpose.msra.mxu0 0.0
        %1464 = vmatprep.subr.mxu0 0.0
        %1465 = vmatpush2.xpose.msra.mxu0 0.0
        %1466 = vmatprep.subr.mxu0 0.0
        %1467 = vmatpush2.xpose.msra.mxu0 0.0
        %1468 = vmatprep.subr.mxu0 0.0
        %1469 = vmatpush2.xpose.msra.mxu0 0.0
        %1470 = vmatprep.subr.mxu0 0.0
        %1471 = vmatpush2.xpose.msra.mxu0 0.0
        %1472 = vmatprep.subr.mxu0 0.0
        %1473 = vmatpush2.xpose.msra.mxu0 0.0
        %1474 = vmatprep.subr.mxu0 0.0
        %1475 = vmatpush2.xpose.msra.mxu0 0.0
        %1476 = vmatprep.subr.mxu0 0.0
        %1477 = vmatpush2.xpose.msra.mxu0 0.0
        %1478 = vmatprep.subr.mxu0 0.0
        %1479 = vmatpush2.xpose.msra.mxu0 0.0
        %1480 = vmatprep.subr.mxu0 0.0
        %1481 = vmatpush2.xpose.msra.mxu0 0.0
        %1482 = vmatprep.subr.mxu0 0.0
        %1483 = vmatpush2.xpose.msra.mxu0 0.0
        %1484 = vmatprep.subr.mxu0 0.0
        %1485 = vmatpush2.xpose.msra.mxu0 0.0
        %1486 = vmatprep.mubr.f32.mxu0 0.0
        %1487 = vmatmul.mubr.f32.gmra.mxu0 %v1417
        %v1488 = vpop.f32.mrf.mxu0
        %v1489 = vadd.f32 0.0, %v1488
        %v1490 = vpop.f32.mrf.mxu0
        %1491 = vdwg.mxu0
        %v1492 = vsel %vm496, %v1489, -inf
        %1493 = vmax.xlane.f32.xlu0 %v1492
        %v1494 = vpop.xlane.xlu0 %1493
        %v1495 = vsub.f32 %v1489, %v1494
        %v1496 = vmul.f32 %v1495, 1.442695
        %v1497 = vpow.pop %v1496
        %v1498 = vsel %vm496, %v1497, 0.0
        %1499 = vadd.xlane.f32.xlu0 %v1498
        %v1500 = vpop.xlane.xlu0 %1499
        %v1501 = vrcp.pop %v1500
        %v1502 = vmul.f32 %v1497, %v1501
        %v1504 = vsel %vm496, %v1502, 0
        %1506 = vmatprep.subr.mxu0 0.0
        %1507 = vmatpush1.msra.mxu0 0.0
        %1508 = vmatprep.subr.mxu0 0.0
        %1509 = vmatpush1.msra.mxu0 0.0
        %1510 = vmatprep.subr.mxu0 0.0
        %1511 = vmatpush1.msra.mxu0 0.0
        %1512 = vmatprep.subr.mxu0 0.0
        %1513 = vmatpush1.msra.mxu0 0.0
        %1514 = vmatprep.subr.mxu0 0.0
        %1515 = vmatpush1.msra.mxu0 0.0
        %1516 = vmatprep.subr.mxu0 0.0
        %1517 = vmatpush1.msra.mxu0 0.0
        %1518 = vmatprep.subr.mxu0 0.0
        %1519 = vmatpush1.msra.mxu0 0.0
        %1520 = vmatprep.subr.mxu0 0.0
        %1521 = vmatpush1.msra.mxu0 0.0
        %1522 = vmatprep.subr.mxu0 0.0
        %1523 = vmatpush1.msra.mxu0 0.0
        %1524 = vmatprep.subr.mxu0 0.0
        %1525 = vmatpush1.msra.mxu0 0.0
        %1526 = vmatprep.subr.mxu0 0.0
        %1527 = vmatpush1.msra.mxu0 0.0
        %1528 = vmatprep.subr.mxu0 0.0
        %1529 = vmatpush1.msra.mxu0 0.0
        %1530 = vmatprep.subr.mxu0 0.0
        %1531 = vmatpush1.msra.mxu0 0.0
        %1532 = vmatprep.subr.mxu0 0.0
        %1533 = vmatpush1.msra.mxu0 0.0
        %1534 = vmatprep.subr.mxu0 0.0
        %1535 = vmatpush1.msra.mxu0 0.0
        %1536 = vmatprep.subr.mxu0 0.0
        %1537 = vmatpush1.msra.mxu0 %v1413
        %1538 = vmatprep.subr.mxu0 0.0
        %1539 = vmatpush2.msra.mxu0 0.0
        %1540 = vmatprep.subr.mxu0 0.0
        %1541 = vmatpush2.msra.mxu0 0.0
        %1542 = vmatprep.subr.mxu0 0.0
        %1543 = vmatpush2.msra.mxu0 0.0
        %1544 = vmatprep.subr.mxu0 0.0
        %1545 = vmatpush2.msra.mxu0 0.0
        %1546 = vmatprep.subr.mxu0 0.0
        %1547 = vmatpush2.msra.mxu0 0.0
        %1548 = vmatprep.subr.mxu0 0.0
        %1549 = vmatpush2.msra.mxu0 0.0
        %1550 = vmatprep.subr.mxu0 0.0
        %1551 = vmatpush2.msra.mxu0 0.0
        %1552 = vmatprep.subr.mxu0 0.0
        %1553 = vmatpush2.msra.mxu0 0.0
        %1554 = vmatprep.subr.mxu0 0.0
        %1555 = vmatpush2.msra.mxu0 0.0
        %1556 = vmatprep.subr.mxu0 0.0
        %1557 = vmatpush2.msra.mxu0 0.0
        %1558 = vmatprep.subr.mxu0 0.0
        %1559 = vmatpush2.msra.mxu0 0.0
        %1560 = vmatprep.subr.mxu0 0.0
        %1561 = vmatpush2.msra.mxu0 0.0
        %1562 = vmatprep.subr.mxu0 0.0
        %1563 = vmatpush2.msra.mxu0 0.0
        %1564 = vmatprep.subr.mxu0 0.0
        %1565 = vmatpush2.msra.mxu0 0.0
        %1566 = vmatprep.subr.mxu0 0.0
        %1567 = vmatpush2.msra.mxu0 0.0
        %1568 = vmatprep.subr.mxu0 0.0
        %1569 = vmatpush2.msra.mxu0 0.0
        %1570 = vmatprep.mubr.f32.mxu0 0.0
        %1571 = vmatmul.mubr.f32.gmra.mxu0 %v1504
        %v1572 = vpop.f32.mrf.mxu0
        %v1573 = vadd.f32 0.0, %v1572
        %v1574 = vpop.f32.mrf.mxu0
        %1575 = vdwg.mxu0
        %s1576 = scalar_lea.vmem %s5, 16
        %v1577 = vld [vmem:[%s1576] sm:$0xff]
        %v1579 = vsel %vm496, %v1573, 0
        %1581 = vmatprep.subr.mxu0 0.0
        %1582 = vmatpush1.msra.mxu0 0.0
        %1583 = vmatprep.subr.mxu0 0.0
        %1584 = vmatpush1.msra.mxu0 0.0
        %1585 = vmatprep.subr.mxu0 0.0
        %1586 = vmatpush1.msra.mxu0 0.0
        %1587 = vmatprep.subr.mxu0 0.0
        %1588 = vmatpush1.msra.mxu0 0.0
        %1589 = vmatprep.subr.mxu0 0.0
        %1590 = vmatpush1.msra.mxu0 0.0
        %1591 = vmatprep.subr.mxu0 0.0
        %1592 = vmatpush1.msra.mxu0 0.0
        %1593 = vmatprep.subr.mxu0 0.0
        %1594 = vmatpush1.msra.mxu0 0.0
        %1595 = vmatprep.subr.mxu0 0.0
        %1596 = vmatpush1.msra.mxu0 0.0
        %1597 = vmatprep.subr.mxu0 0.0
        %1598 = vmatpush1.msra.mxu0 0.0
        %1599 = vmatprep.subr.mxu0 0.0
        %1600 = vmatpush1.msra.mxu0 0.0
        %1601 = vmatprep.subr.mxu0 0.0
        %1602 = vmatpush1.msra.mxu0 0.0
        %1603 = vmatprep.subr.mxu0 0.0
        %1604 = vmatpush1.msra.mxu0 0.0
        %1605 = vmatprep.subr.mxu0 0.0
        %1606 = vmatpush1.msra.mxu0 0.0
        %1607 = vmatprep.subr.mxu0 0.0
        %1608 = vmatpush1.msra.mxu0 0.0
        %1609 = vmatprep.subr.mxu0 0.0
        %1610 = vmatpush1.msra.mxu0 0.0
        %1611 = vmatprep.subr.mxu0 0.0
        %1612 = vmatpush1.msra.mxu0 %v1577
        %1613 = vmatprep.subr.mxu0 0.0
        %1614 = vmatpush2.msra.mxu0 0.0
        %1615 = vmatprep.subr.mxu0 0.0
        %1616 = vmatpush2.msra.mxu0 0.0
        %1617 = vmatprep.subr.mxu0 0.0
        %1618 = vmatpush2.msra.mxu0 0.0
        %1619 = vmatprep.subr.mxu0 0.0
        %1620 = vmatpush2.msra.mxu0 0.0
        %1621 = vmatprep.subr.mxu0 0.0
        %1622 = vmatpush2.msra.mxu0 0.0
        %1623 = vmatprep.subr.mxu0 0.0
        %1624 = vmatpush2.msra.mxu0 0.0
        %1625 = vmatprep.subr.mxu0 0.0
        %1626 = vmatpush2.msra.mxu0 0.0
        %1627 = vmatprep.subr.mxu0 0.0
        %1628 = vmatpush2.msra.mxu0 0.0
        %1629 = vmatprep.subr.mxu0 0.0
        %1630 = vmatpush2.msra.mxu0 0.0
        %1631 = vmatprep.subr.mxu0 0.0
        %1632 = vmatpush2.msra.mxu0 0.0
        %1633 = vmatprep.subr.mxu0 0.0
        %1634 = vmatpush2.msra.mxu0 0.0
        %1635 = vmatprep.subr.mxu0 0.0
        %1636 = vmatpush2.msra.mxu0 0.0
        %1637 = vmatprep.subr.mxu0 0.0
        %1638 = vmatpush2.msra.mxu0 0.0
        %1639 = vmatprep.subr.mxu0 0.0
        %1640 = vmatpush2.msra.mxu0 0.0
        %1641 = vmatprep.subr.mxu0 0.0
        %1642 = vmatpush2.msra.mxu0 0.0
        %1643 = vmatprep.subr.mxu0 0.0
        %1644 = vmatpush2.msra.mxu0 0.0
        %1645 = vmatprep.mubr.f32.mxu0 0.0
        %1646 = vmatmul.mubr.f32.gmra.mxu0 %v1579
        %v1647 = vpop.f32.mrf.mxu0
        %v1648 = vadd.f32 0.0, %v1647
        %v1649 = vpop.f32.mrf.mxu0
        %1650 = vdwg.mxu0
        %v1651 = vadd.f32 %v1188, %v1648
        %s1652 = scalar_lea.vmem %s2, 96
        %v1653 = vld [vmem:[%s1652] sm:$0xff]
        %v1654 = vld [vmem:[%s1652 + $0x8] sm:$0xff]
        %v1655 = vld [vmem:[%s1652 + $0x10] sm:$0xff]
        %v1656 = vld [vmem:[%s1652 + $0x18] sm:$0xff]
        %1657 = vmatprep.subr.mxu0 0.0
        %1658 = vmatpush1.msra.mxu0 0.0
        %1659 = vmatprep.subr.mxu0 0.0
        %1660 = vmatpush1.msra.mxu0 0.0
        %1661 = vmatprep.subr.mxu0 0.0
        %1662 = vmatpush1.msra.mxu0 0.0
        %1663 = vmatprep.subr.mxu0 0.0
        %1664 = vmatpush1.msra.mxu0 0.0
        %1665 = vmatprep.subr.mxu0 0.0
        %1666 = vmatpush1.msra.mxu0 0.0
        %1667 = vmatprep.subr.mxu0 0.0
        %1668 = vmatpush1.msra.mxu0 0.0
        %1669 = vmatprep.subr.mxu0 0.0
        %1670 = vmatpush1.msra.mxu0 0.0
        %1671 = vmatprep.subr.mxu0 0.0
        %1672 = vmatpush1.msra.mxu0 0.0
        %1673 = vmatprep.subr.mxu0 0.0
        %1674 = vmatpush1.msra.mxu0 0.0
        %1675 = vmatprep.subr.mxu0 0.0
        %1676 = vmatpush1.msra.mxu0 0.0
        %1677 = vmatprep.subr.mxu0 0.0
        %1678 = vmatpush1.msra.mxu0 0.0
        %1679 = vmatprep.subr.mxu0 0.0
        %1680 = vmatpush1.msra.mxu0 0.0
        %1681 = vmatprep.subr.mxu0 0.0
        %1682 = vmatpush1.msra.mxu0 %v1656
        %1683 = vmatprep.subr.mxu0 0.0
        %1684 = vmatpush1.msra.mxu0 %v1655
        %1685 = vmatprep.subr.mxu0 0.0
        %1686 = vmatpush1.msra.mxu0 %v1654
        %1687 = vmatprep.subr.mxu0 0.0
        %1688 = vmatpush1.msra.mxu0 %v1653
        %1689 = vmatprep.subr.mxu0 0.0
        %1690 = vmatpush2.msra.mxu0 0.0
        %1691 = vmatprep.subr.mxu0 0.0
        %1692 = vmatpush2.msra.mxu0 0.0
        %1693 = vmatprep.subr.mxu0 0.0
        %1694 = vmatpush2.msra.mxu0 0.0
        %1695 = vmatprep.subr.mxu0 0.0
        %1696 = vmatpush2.msra.mxu0 0.0
        %1697 = vmatprep.subr.mxu0 0.0
        %1698 = vmatpush2.msra.mxu0 0.0
        %1699 = vmatprep.subr.mxu0 0.0
        %1700 = vmatpush2.msra.mxu0 0.0
        %1701 = vmatprep.subr.mxu0 0.0
        %1702 = vmatpush2.msra.mxu0 0.0
        %1703 = vmatprep.subr.mxu0 0.0
        %1704 = vmatpush2.msra.mxu0 0.0
        %1705 = vmatprep.subr.mxu0 0.0
        %1706 = vmatpush2.msra.mxu0 0.0
        %1707 = vmatprep.subr.mxu0 0.0
        %1708 = vmatpush2.msra.mxu0 0.0
        %1709 = vmatprep.subr.mxu0 0.0
        %1710 = vmatpush2.msra.mxu0 0.0
        %1711 = vmatprep.subr.mxu0 0.0
        %1712 = vmatpush2.msra.mxu0 0.0
        %1713 = vmatprep.subr.mxu0 0.0
        %1714 = vmatpush2.msra.mxu0 0.0
        %1715 = vmatprep.subr.mxu0 0.0
        %1716 = vmatpush2.msra.mxu0 0.0
        %1717 = vmatprep.subr.mxu0 0.0
        %1718 = vmatpush2.msra.mxu0 0.0
        %1719 = vmatprep.subr.mxu0 0.0
        %1720 = vmatpush2.msra.mxu0 0.0
        %1721 = vmatprep.mubr.f32.mxu0 0.0
        %1722 = vmatmul.mubr.f32.gmra.mxu0 %v273
        %v1723 = vpop.f32.mrf.mxu0
        %v1724 = vadd.f32 0.0, %v1723
        %v1725 = vpop.f32.mrf.mxu0
        %1726 = vdwg.mxu0
        %s1727 = scalar_lea.vmem %s3, 96
        %v1728 = vld [vmem:[%s1727] sm:$0xff]
        %v1729 = vld [vmem:[%s1727 + $0x8] sm:$0xff]
        %v1730 = vld [vmem:[%s1727 + $0x10] sm:$0xff]
        %v1731 = vld [vmem:[%s1727 + $0x18] sm:$0xff]
        %1732 = vmatprep.subr.mxu0 0.0
        %1733 = vmatpush1.msra.mxu0 0.0
        %1734 = vmatprep.subr.mxu0 0.0
        %1735 = vmatpush1.msra.mxu0 0.0
        %1736 = vmatprep.subr.mxu0 0.0
        %1737 = vmatpush1.msra.mxu0 0.0
        %1738 = vmatprep.subr.mxu0 0.0
        %1739 = vmatpush1.msra.mxu0 0.0
        %1740 = vmatprep.subr.mxu0 0.0
        %1741 = vmatpush1.msra.mxu0 0.0
        %1742 = vmatprep.subr.mxu0 0.0
        %1743 = vmatpush1.msra.mxu0 0.0
        %1744 = vmatprep.subr.mxu0 0.0
        %1745 = vmatpush1.msra.mxu0 0.0
        %1746 = vmatprep.subr.mxu0 0.0
        %1747 = vmatpush1.msra.mxu0 0.0
        %1748 = vmatprep.subr.mxu0 0.0
        %1749 = vmatpush1.msra.mxu0 0.0
        %1750 = vmatprep.subr.mxu0 0.0
        %1751 = vmatpush1.msra.mxu0 0.0
        %1752 = vmatprep.subr.mxu0 0.0
        %1753 = vmatpush1.msra.mxu0 0.0
        %1754 = vmatprep.subr.mxu0 0.0
        %1755 = vmatpush1.msra.mxu0 0.0
        %1756 = vmatprep.subr.mxu0 0.0
        %1757 = vmatpush1.msra.mxu0 %v1731
        %1758 = vmatprep.subr.mxu0 0.0
        %1759 = vmatpush1.msra.mxu0 %v1730
        %1760 = vmatprep.subr.mxu0 0.0
        %1761 = vmatpush1.msra.mxu0 %v1729
        %1762 = vmatprep.subr.mxu0 0.0
        %1763 = vmatpush1.msra.mxu0 %v1728
        %1764 = vmatprep.subr.mxu0 0.0
        %1765 = vmatpush2.msra.mxu0 0.0
        %1766 = vmatprep.subr.mxu0 0.0
        %1767 = vmatpush2.msra.mxu0 0.0
        %1768 = vmatprep.subr.mxu0 0.0
        %1769 = vmatpush2.msra.mxu0 0.0
        %1770 = vmatprep.subr.mxu0 0.0
        %1771 = vmatpush2.msra.mxu0 0.0
        %1772 = vmatprep.subr.mxu0 0.0
        %1773 = vmatpush2.msra.mxu0 0.0
        %1774 = vmatprep.subr.mxu0 0.0
        %1775 = vmatpush2.msra.mxu0 0.0
        %1776 = vmatprep.subr.mxu0 0.0
        %1777 = vmatpush2.msra.mxu0 0.0
        %1778 = vmatprep.subr.mxu0 0.0
        %1779 = vmatpush2.msra.mxu0 0.0
        %1780 = vmatprep.subr.mxu0 0.0
        %1781 = vmatpush2.msra.mxu0 0.0
        %1782 = vmatprep.subr.mxu0 0.0
        %1783 = vmatpush2.msra.mxu0 0.0
        %1784 = vmatprep.subr.mxu0 0.0
        %1785 = vmatpush2.msra.mxu0 0.0
        %1786 = vmatprep.subr.mxu0 0.0
        %1787 = vmatpush2.msra.mxu0 0.0
        %1788 = vmatprep.subr.mxu0 0.0
        %1789 = vmatpush2.msra.mxu0 0.0
        %1790 = vmatprep.subr.mxu0 0.0
        %1791 = vmatpush2.msra.mxu0 0.0
        %1792 = vmatprep.subr.mxu0 0.0
        %1793 = vmatpush2.msra.mxu0 0.0
        %1794 = vmatprep.subr.mxu0 0.0
        %1795 = vmatpush2.msra.mxu0 0.0
        %1796 = vmatprep.mubr.f32.mxu0 0.0
        %1797 = vmatmul.mubr.f32.gmra.mxu0 %v350
        %v1798 = vpop.f32.mrf.mxu0
        %v1799 = vadd.f32 0.0, %v1798
        %v1800 = vpop.f32.mrf.mxu0
        %1801 = vdwg.mxu0
        %s1802 = scalar_lea.vmem %s4, 96
        %v1803 = vld [vmem:[%s1802] sm:$0xff]
        %v1804 = vld [vmem:[%s1802 + $0x8] sm:$0xff]
        %v1805 = vld [vmem:[%s1802 + $0x10] sm:$0xff]
        %v1806 = vld [vmem:[%s1802 + $0x18] sm:$0xff]
        %1807 = vmatprep.subr.mxu0 0.0
        %1808 = vmatpush1.msra.mxu0 0.0
        %1809 = vmatprep.subr.mxu0 0.0
        %1810 = vmatpush1.msra.mxu0 0.0
        %1811 = vmatprep.subr.mxu0 0.0
        %1812 = vmatpush1.msra.mxu0 0.0
        %1813 = vmatprep.subr.mxu0 0.0
        %1814 = vmatpush1.msra.mxu0 0.0
        %1815 = vmatprep.subr.mxu0 0.0
        %1816 = vmatpush1.msra.mxu0 0.0
        %1817 = vmatprep.subr.mxu0 0.0
        %1818 = vmatpush1.msra.mxu0 0.0
        %1819 = vmatprep.subr.mxu0 0.0
        %1820 = vmatpush1.msra.mxu0 0.0
        %1821 = vmatprep.subr.mxu0 0.0
        %1822 = vmatpush1.msra.mxu0 0.0
        %1823 = vmatprep.subr.mxu0 0.0
        %1824 = vmatpush1.msra.mxu0 0.0
        %1825 = vmatprep.subr.mxu0 0.0
        %1826 = vmatpush1.msra.mxu0 0.0
        %1827 = vmatprep.subr.mxu0 0.0
        %1828 = vmatpush1.msra.mxu0 0.0
        %1829 = vmatprep.subr.mxu0 0.0
        %1830 = vmatpush1.msra.mxu0 0.0
        %1831 = vmatprep.subr.mxu0 0.0
        %1832 = vmatpush1.msra.mxu0 %v1806
        %1833 = vmatprep.subr.mxu0 0.0
        %1834 = vmatpush1.msra.mxu0 %v1805
        %1835 = vmatprep.subr.mxu0 0.0
        %1836 = vmatpush1.msra.mxu0 %v1804
        %1837 = vmatprep.subr.mxu0 0.0
        %1838 = vmatpush1.msra.mxu0 %v1803
        %1839 = vmatprep.subr.mxu0 0.0
        %1840 = vmatpush2.msra.mxu0 0.0
        %1841 = vmatprep.subr.mxu0 0.0
        %1842 = vmatpush2.msra.mxu0 0.0
        %1843 = vmatprep.subr.mxu0 0.0
        %1844 = vmatpush2.msra.mxu0 0.0
        %1845 = vmatprep.subr.mxu0 0.0
        %1846 = vmatpush2.msra.mxu0 0.0
        %1847 = vmatprep.subr.mxu0 0.0
        %1848 = vmatpush2.msra.mxu0 0.0
        %1849 = vmatprep.subr.mxu0 0.0
        %1850 = vmatpush2.msra.mxu0 0.0
        %1851 = vmatprep.subr.mxu0 0.0
        %1852 = vmatpush2.msra.mxu0 0.0
        %1853 = vmatprep.subr.mxu0 0.0
        %1854 = vmatpush2.msra.mxu0 0.0
        %1855 = vmatprep.subr.mxu0 0.0
        %1856 = vmatpush2.msra.mxu0 0.0
        %1857 = vmatprep.subr.mxu0 0.0
        %1858 = vmatpush2.msra.mxu0 0.0
        %1859 = vmatprep.subr.mxu0 0.0
        %1860 = vmatpush2.msra.mxu0 0.0
        %1861 = vmatprep.subr.mxu0 0.0
        %1862 = vmatpush2.msra.mxu0 0.0
        %1863 = vmatprep.subr.mxu0 0.0
        %1864 = vmatpush2.msra.mxu0 0.0
        %1865 = vmatprep.subr.mxu0 0.0
        %1866 = vmatpush2.msra.mxu0 0.0
        %1867 = vmatprep.subr.mxu0 0.0
        %1868 = vmatpush2.msra.mxu0 0.0
        %1869 = vmatprep.subr.mxu0 0.0
        %1870 = vmatpush2.msra.mxu0 0.0
        %1871 = vmatprep.mubr.f32.mxu0 0.0
        %1872 = vmatmul.mubr.f32.gmra.mxu0 %v350
        %v1873 = vpop.f32.mrf.mxu0
        %v1874 = vadd.f32 0.0, %v1873
        %v1875 = vpop.f32.mrf.mxu0
        %1876 = vdwg.mxu0
        %v1878 = vsel %vm496, %v1724, 0
        %v1881 = vsel %vm496, %v1799, 0
        %1883 = vmatprep.subr.mxu0 0.0
        %1884 = vmatpush1.xpose.msra.mxu0 0.0
        %1885 = vmatprep.subr.mxu0 0.0
        %1886 = vmatpush1.xpose.msra.mxu0 0.0
        %1887 = vmatprep.subr.mxu0 0.0
        %1888 = vmatpush1.xpose.msra.mxu0 0.0
        %1889 = vmatprep.subr.mxu0 0.0
        %1890 = vmatpush1.xpose.msra.mxu0 0.0
        %1891 = vmatprep.subr.mxu0 0.0
        %1892 = vmatpush1.xpose.msra.mxu0 0.0
        %1893 = vmatprep.subr.mxu0 0.0
        %1894 = vmatpush1.xpose.msra.mxu0 0.0
        %1895 = vmatprep.subr.mxu0 0.0
        %1896 = vmatpush1.xpose.msra.mxu0 0.0
        %1897 = vmatprep.subr.mxu0 0.0
        %1898 = vmatpush1.xpose.msra.mxu0 0.0
        %1899 = vmatprep.subr.mxu0 0.0
        %1900 = vmatpush1.xpose.msra.mxu0 0.0
        %1901 = vmatprep.subr.mxu0 0.0
        %1902 = vmatpush1.xpose.msra.mxu0 0.0
        %1903 = vmatprep.subr.mxu0 0.0
        %1904 = vmatpush1.xpose.msra.mxu0 0.0
        %1905 = vmatprep.subr.mxu0 0.0
        %1906 = vmatpush1.xpose.msra.mxu0 0.0
        %1907 = vmatprep.subr.mxu0 0.0
        %1908 = vmatpush1.xpose.msra.mxu0 0.0
        %1909 = vmatprep.subr.mxu0 0.0
        %1910 = vmatpush1.xpose.msra.mxu0 0.0
        %1911 = vmatprep.subr.mxu0 0.0
        %1912 = vmatpush1.xpose.msra.mxu0 0.0
        %1913 = vmatprep.subr.mxu0 0.0
        %1914 = vmatpush1.xpose.msra.mxu0 %v1881
        %1915 = vmatprep.subr.mxu0 0.0
        %1916 = vmatpush2.xpose.msra.mxu0 0.0
        %1917 = vmatprep.subr.mxu0 0.0
        %1918 = vmatpush2.xpose.msra.mxu0 0.0
        %1919 = vmatprep.subr.mxu0 0.0
        %1920 = vmatpush2.xpose.msra.mxu0 0.0
        %1921 = vmatprep.subr.mxu0 0.0
        %1922 = vmatpush2.xpose.msra.mxu0 0.0
        %1923 = vmatprep.subr.mxu0 0.0
        %1924 = vmatpush2.xpose.msra.mxu0 0.0
        %1925 = vmatprep.subr.mxu0 0.0
        %1926 = vmatpush2.xpose.msra.mxu0 0.0
        %1927 = vmatprep.subr.mxu0 0.0
        %1928 = vmatpush2.xpose.msra.mxu0 0.0
        %1929 = vmatprep.subr.mxu0 0.0
        %1930 = vmatpush2.xpose.msra.mxu0 0.0
        %1931 = vmatprep.subr.mxu0 0.0
        %1932 = vmatpush2.xpose.msra.mxu0 0.0
        %1933 = vmatprep.subr.mxu0 0.0
        %1934 = vmatpush2.xpose.msra.mxu0 0.0
        %1935 = vmatprep.subr.mxu0 0.0
        %1936 = vmatpush2.xpose.msra.mxu0 0.0
        %1937 = vmatprep.subr.mxu0 0.0
        %1938 = vmatpush2.xpose.msra.mxu0 0.0
        %1939 = vmatprep.subr.mxu0 0.0
        %1940 = vmatpush2.xpose.msra.mxu0 0.0
        %1941 = vmatprep.subr.mxu0 0.0
        %1942 = vmatpush2.xpose.msra.mxu0 0.0
        %1943 = vmatprep.subr.mxu0 0.0
        %1944 = vmatpush2.xpose.msra.mxu0 0.0
        %1945 = vmatprep.subr.mxu0 0.0
        %1946 = vmatpush2.xpose.msra.mxu0 0.0
        %1947 = vmatprep.mubr.f32.mxu0 0.0
        %1948 = vmatmul.mubr.f32.gmra.mxu0 %v1878
        %v1949 = vpop.f32.mrf.mxu0
        %v1950 = vadd.f32 0.0, %v1949
        %v1951 = vpop.f32.mrf.mxu0
        %1952 = vdwg.mxu0
        %v1953 = vsel %vm496, %v1950, -inf
        %1954 = vmax.xlane.f32.xlu0 %v1953
        %v1955 = vpop.xlane.xlu0 %1954
        %v1956 = vsub.f32 %v1950, %v1955
        %v1957 = vmul.f32 %v1956, 1.442695
        %v1958 = vpow.pop %v1957
        %v1959 = vsel %vm496, %v1958, 0.0
        %1960 = vadd.xlane.f32.xlu0 %v1959
        %v1961 = vpop.xlane.xlu0 %1960
        %v1962 = vrcp.pop %v1961
        %v1963 = vmul.f32 %v1958, %v1962
        %v1965 = vsel %vm496, %v1963, 0
        %1967 = vmatprep.subr.mxu0 0.0
        %1968 = vmatpush1.msra.mxu0 0.0
        %1969 = vmatprep.subr.mxu0 0.0
        %1970 = vmatpush1.msra.mxu0 0.0
        %1971 = vmatprep.subr.mxu0 0.0
        %1972 = vmatpush1.msra.mxu0 0.0
        %1973 = vmatprep.subr.mxu0 0.0
        %1974 = vmatpush1.msra.mxu0 0.0
        %1975 = vmatprep.subr.mxu0 0.0
        %1976 = vmatpush1.msra.mxu0 0.0
        %1977 = vmatprep.subr.mxu0 0.0
        %1978 = vmatpush1.msra.mxu0 0.0
        %1979 = vmatprep.subr.mxu0 0.0
        %1980 = vmatpush1.msra.mxu0 0.0
        %1981 = vmatprep.subr.mxu0 0.0
        %1982 = vmatpush1.msra.mxu0 0.0
        %1983 = vmatprep.subr.mxu0 0.0
        %1984 = vmatpush1.msra.mxu0 0.0
        %1985 = vmatprep.subr.mxu0 0.0
        %1986 = vmatpush1.msra.mxu0 0.0
        %1987 = vmatprep.subr.mxu0 0.0
        %1988 = vmatpush1.msra.mxu0 0.0
        %1989 = vmatprep.subr.mxu0 0.0
        %1990 = vmatpush1.msra.mxu0 0.0
        %1991 = vmatprep.subr.mxu0 0.0
        %1992 = vmatpush1.msra.mxu0 0.0
        %1993 = vmatprep.subr.mxu0 0.0
        %1994 = vmatpush1.msra.mxu0 0.0
        %1995 = vmatprep.subr.mxu0 0.0
        %1996 = vmatpush1.msra.mxu0 0.0
        %1997 = vmatprep.subr.mxu0 0.0
        %1998 = vmatpush1.msra.mxu0 %v1874
        %1999 = vmatprep.subr.mxu0 0.0
        %2000 = vmatpush2.msra.mxu0 0.0
        %2001 = vmatprep.subr.mxu0 0.0
        %2002 = vmatpush2.msra.mxu0 0.0
        %2003 = vmatprep.subr.mxu0 0.0
        %2004 = vmatpush2.msra.mxu0 0.0
        %2005 = vmatprep.subr.mxu0 0.0
        %2006 = vmatpush2.msra.mxu0 0.0
        %2007 = vmatprep.subr.mxu0 0.0
        %2008 = vmatpush2.msra.mxu0 0.0
        %2009 = vmatprep.subr.mxu0 0.0
        %2010 = vmatpush2.msra.mxu0 0.0
        %2011 = vmatprep.subr.mxu0 0.0
        %2012 = vmatpush2.msra.mxu0 0.0
        %2013 = vmatprep.subr.mxu0 0.0
        %2014 = vmatpush2.msra.mxu0 0.0
        %2015 = vmatprep.subr.mxu0 0.0
        %2016 = vmatpush2.msra.mxu0 0.0
        %2017 = vmatprep.subr.mxu0 0.0
        %2018 = vmatpush2.msra.mxu0 0.0
        %2019 = vmatprep.subr.mxu0 0.0
        %2020 = vmatpush2.msra.mxu0 0.0
        %2021 = vmatprep.subr.mxu0 0.0
        %2022 = vmatpush2.msra.mxu0 0.0
        %2023 = vmatprep.subr.mxu0 0.0
        %2024 = vmatpush2.msra.mxu0 0.0
        %2025 = vmatprep.subr.mxu0 0.0
        %2026 = vmatpush2.msra.mxu0 0.0
        %2027 = vmatprep.subr.mxu0 0.0
        %2028 = vmatpush2.msra.mxu0 0.0
        %2029 = vmatprep.subr.mxu0 0.0
        %2030 = vmatpush2.msra.mxu0 0.0
        %2031 = vmatprep.mubr.f32.mxu0 0.0
        %2032 = vmatmul.mubr.f32.gmra.mxu0 %v1965
        %v2033 = vpop.f32.mrf.mxu0
        %v2034 = vadd.f32 0.0, %v2033
        %v2035 = vpop.f32.mrf.mxu0
        %2036 = vdwg.mxu0
        %s2037 = scalar_lea.vmem %s5, 24
        %v2038 = vld [vmem:[%s2037] sm:$0xff]
        %v2040 = vsel %vm496, %v2034, 0
        %2042 = vmatprep.subr.mxu0 0.0
        %2043 = vmatpush1.msra.mxu0 0.0
        %2044 = vmatprep.subr.mxu0 0.0
        %2045 = vmatpush1.msra.mxu0 0.0
        %2046 = vmatprep.subr.mxu0 0.0
        %2047 = vmatpush1.msra.mxu0 0.0
        %2048 = vmatprep.subr.mxu0 0.0
        %2049 = vmatpush1.msra.mxu0 0.0
        %2050 = vmatprep.subr.mxu0 0.0
        %2051 = vmatpush1.msra.mxu0 0.0
        %2052 = vmatprep.subr.mxu0 0.0
        %2053 = vmatpush1.msra.mxu0 0.0
        %2054 = vmatprep.subr.mxu0 0.0
        %2055 = vmatpush1.msra.mxu0 0.0
        %2056 = vmatprep.subr.mxu0 0.0
        %2057 = vmatpush1.msra.mxu0 0.0
        %2058 = vmatprep.subr.mxu0 0.0
        %2059 = vmatpush1.msra.mxu0 0.0
        %2060 = vmatprep.subr.mxu0 0.0
        %2061 = vmatpush1.msra.mxu0 0.0
        %2062 = vmatprep.subr.mxu0 0.0
        %2063 = vmatpush1.msra.mxu0 0.0
        %2064 = vmatprep.subr.mxu0 0.0
        %2065 = vmatpush1.msra.mxu0 0.0
        %2066 = vmatprep.subr.mxu0 0.0
        %2067 = vmatpush1.msra.mxu0 0.0
        %2068 = vmatprep.subr.mxu0 0.0
        %2069 = vmatpush1.msra.mxu0 0.0
        %2070 = vmatprep.subr.mxu0 0.0
        %2071 = vmatpush1.msra.mxu0 0.0
        %2072 = vmatprep.subr.mxu0 0.0
        %2073 = vmatpush1.msra.mxu0 %v2038
        %2074 = vmatprep.subr.mxu0 0.0
        %2075 = vmatpush2.msra.mxu0 0.0
        %2076 = vmatprep.subr.mxu0 0.0
        %2077 = vmatpush2.msra.mxu0 0.0
        %2078 = vmatprep.subr.mxu0 0.0
        %2079 = vmatpush2.msra.mxu0 0.0
        %2080 = vmatprep.subr.mxu0 0.0
        %2081 = vmatpush2.msra.mxu0 0.0
        %2082 = vmatprep.subr.mxu0 0.0
        %2083 = vmatpush2.msra.mxu0 0.0
        %2084 = vmatprep.subr.mxu0 0.0
        %2085 = vmatpush2.msra.mxu0 0.0
        %2086 = vmatprep.subr.mxu0 0.0
        %2087 = vmatpush2.msra.mxu0 0.0
        %2088 = vmatprep.subr.mxu0 0.0
        %2089 = vmatpush2.msra.mxu0 0.0
        %2090 = vmatprep.subr.mxu0 0.0
        %2091 = vmatpush2.msra.mxu0 0.0
        %2092 = vmatprep.subr.mxu0 0.0
        %2093 = vmatpush2.msra.mxu0 0.0
        %2094 = vmatprep.subr.mxu0 0.0
        %2095 = vmatpush2.msra.mxu0 0.0
        %2096 = vmatprep.subr.mxu0 0.0
        %2097 = vmatpush2.msra.mxu0 0.0
        %2098 = vmatprep.subr.mxu0 0.0
        %2099 = vmatpush2.msra.mxu0 0.0
        %2100 = vmatprep.subr.mxu0 0.0
        %2101 = vmatpush2.msra.mxu0 0.0
        %2102 = vmatprep.subr.mxu0 0.0
        %2103 = vmatpush2.msra.mxu0 0.0
        %2104 = vmatprep.subr.mxu0 0.0
        %2105 = vmatpush2.msra.mxu0 0.0
        %2106 = vmatprep.mubr.f32.mxu0 0.0
        %2107 = vmatmul.mubr.f32.gmra.mxu0 %v2040
        %v2108 = vpop.f32.mrf.mxu0
        %v2109 = vadd.f32 0.0, %v2108
        %v2110 = vpop.f32.mrf.mxu0
        %2111 = vdwg.mxu0
        %v2112 = vadd.f32 %v1651, %v2109
        %2113 = vst.msk [vmem:[%s255] sm:$0xff] %vm271, %v2112
        %s2114 = sand.u32 %s164, 1
        %s2115 = scalar_lea.sflag [#allocation3], %s2114
        %s2116 = sand.u32 %s164, 1
        %s2117 = smul.addr %s2116, 8
        %s2118 = scalar_lea.vmem [#allocation2], %s2117
        // Predicated region
        $region45: #{tpu_custom_call.1} parent=43 // pred_check
          %p2119 = pneg %p174
        $region46: #{tpu_custom_call.1} parent=43 // pred_check_branch
          %2121 = sbr.rel (%p2119) target = $region48
        $region47: #{tpu_custom_call.1} parent=43 // pred_region
          %s2123 = ssub.s32 128, 128
          %2124 = vsyncadd %s2115, %s2123
          %s2125 = smul.addr %s20, 128
          %s2126 = scalar_lea.hbm %s6, %s2125
          %s2128 = sshll.u32 %s2118, 4
          %s2129 = int_to_ptr.vmem [resolvable:$true] %s2128
          %2131 = dma.vmem_to_hbm [thread:$0]  %s2129, 128, %s2126, %s2115
        $region48: #{tpu_custom_call.1} parent=43 // pred_fallthru
          _
      $region44: #{tpu_custom_call.1} parent=5 // pred_fallthru
        _
      %p2132 = scmp.le.s32.totalorder 2, %s15
      // Predicated region
      $region49: #{tpu_custom_call.1} parent=5 // pred_check
        %p2133 = pneg %p2132
      $region50: #{tpu_custom_call.1} parent=5 // pred_check_branch
        %2135 = sbr.rel (%p2133) target = $region52
      $region51: #{tpu_custom_call.1} parent=5 // pred_region
        %s2136 = ssub.s32 %s15, 2
        // Predicated region
        $region53: #{tpu_custom_call.1} parent=51 // pred_check
          %p2137 = pneg %p180
        $region54: #{tpu_custom_call.1} parent=51 // pred_check_branch
          %2139 = sbr.rel (%p2137) target = $region56
        $region55: #{tpu_custom_call.1} parent=51 // pred_region
          %s2140 = sand.u32 %s165, 1
          %s2141 = scalar_lea.sflag [#allocation3], %s2140
          %s2142 = sand.u32 %s165, 1
          %s2143 = smul.addr %s2142, 8
          %s2144 = scalar_lea.vmem [#allocation2], %s2143
          %2145 = dma.done %s2141, 128
        $region56: #{tpu_custom_call.1} parent=51 // pred_fallthru
          _
      $region52: #{tpu_custom_call.1} parent=5 // pred_fallthru
        _
    $region6: #{tpu_custom_call.1} parent=1 // loop_footer
      %s19 = sadd.s32 1, %s15
    $region7: #{tpu_custom_call.1} parent=1 // loop_footer_branch
      %14 = sbr.rel target = $region3
    $region8: #{tpu_custom_call.1} parent=1 // loop_exit
      _
    %2146 = vsyncpa [#allocation3], 1
    %s2147 = scalar_lea.sflag [#allocation3], 1
    %2148 = vsyncpa %s2147, 1

</llo_original>
